<compile_context>
chip_gen: v7x
topology: tpu7x:2x2x1
jax: 0.10.0
libtpu: 0.0.40
codegen_flags: <defaults>
</compile_context>

<pallas_src>
import functools

import jax
import jax.numpy as jnp
from jax import lax
from jax.experimental import pallas as pl
from jax.experimental.pallas import tpu as pltpu

IGNORE = -100000.0  # matches the module's IGNORE buffer


def attention_kernel(x_ref, pos_ref, wqk_ref, wv_ref, wo_ref, o_ref, *,
                     n_heads: int, d_head: int):
    # x_ref   : (Bb, seq, d_model)      Bb batch rows per grid step
    # pos_ref : (seq, d_model)
    # wqk_ref : (d_model, 2*n_qk)       [W_Q^T/sqrt(d_head) | W_K^T]
    # wv_ref  : (d_model, n_qk)         W_V^T
    # wo_ref  : (n_qk, d_model)         W_O^T (head-major rows)
    # o_ref   : (Bb, seq, d_model)
    Bb, S, D = x_ref.shape
    H, Dh = n_heads, d_head
    n_qk = H * Dh
    M = Bb * S

    x = x_ref[...]                                   # (Bb, S, D), input dtype
    in_dt = x.dtype
    qk_in = x + pos_ref[...]                         # pos broadcast over batch

    x2 = x.reshape(M, D)
    qkin2 = qk_in.reshape(M, D)

    # Fused Q|K projection (single MXU call, N = 2*n_qk) and V projection.
    # 1/sqrt(d_head) is already folded into the Q columns of wqk (host-side).
    qk = jnp.dot(qkin2, wqk_ref[...], preferred_element_type=jnp.float32)
    v = jnp.dot(x2, wv_ref[...], preferred_element_type=jnp.float32)
    qk = qk.astype(in_dt)                            # keep MXU operands narrow
    v = v.astype(in_dt)

    # Head split without per-head lane slicing: batched minor-2D transposes and
    # tile-aligned reshapes only. Shapes: (Bb*H, S, Dh) for Q, (Bb*H, Dh, S)
    # for K and V (the "transposed" operands of the batched matmuls below).
    qk_t = jnp.transpose(qk.reshape(Bb, S, 2 * n_qk), (0, 2, 1))  # (Bb, 2n_qk, S)
    q_h = jnp.transpose(qk_t[:, :n_qk, :].reshape(Bb * H, Dh, S),
                        (0, 2, 1))                                # (BH, S, Dh)
    k_t = qk_t[:, n_qk:, :].reshape(Bb * H, Dh, S)                # (BH, Dh, S)
    v_t = jnp.transpose(v.reshape(Bb, S, n_qk),
                        (0, 2, 1)).reshape(Bb * H, Dh, S)         # (BH, Dh, S)

    # Scores for ALL heads in one batched matmul (heads folded into batch dim).
    s = jnp.einsum('bqd,bdk->bqk', q_h, k_t,
                   preferred_element_type=jnp.float32)            # (BH, S, S)
    row = lax.broadcasted_iota(jnp.int32, s.shape, 1)             # query pos
    col = lax.broadcasted_iota(jnp.int32, s.shape, 2)             # key pos
    s = jnp.where(col <= row, s, jnp.float32(IGNORE))

    # Numerically-stable softmax in f32 with DEFERRED normalization: the divide
    # happens once per (head, query) row on z, not on the full (S, S) matrix.
    m = jnp.max(s, axis=-1, keepdims=True)
    e = jnp.exp(s - m)
    denom = jnp.sum(e, axis=-1, keepdims=True)                    # (BH, S, 1)

    z = jnp.einsum('bqk,bdk->bqd', e.astype(in_dt), v_t,
                   preferred_element_type=jnp.float32)            # (BH, S, Dh)
    z = z * pl.reciprocal(denom, approx=True)                     # per-head norm

    # Back to (M, n_qk) (head-major lanes) and ONE fused output projection.
    z = jnp.transpose(z.astype(in_dt), (0, 2, 1)).reshape(Bb, n_qk, S)
    z2 = jnp.transpose(z, (0, 2, 1)).reshape(M, n_qk)             # (M, n_qk)
    out = jnp.dot(z2, wo_ref[...], preferred_element_type=jnp.float32)
    o_ref[...] = out.reshape(Bb, S, D).astype(o_ref.dtype)


def _pick_block_batch(batch, seq, d_model, n_heads, d_head, itemsize,
                      budget_bytes=8 * 1024 * 1024):
    """Largest divisor of `batch` whose per-step working set stays small."""
    n_qk = n_heads * d_head
    best = 1
    for bb in range(1, batch + 1):
        if batch % bb:
            continue
        scores = 3 * bb * n_heads * seq * seq * 4        # s / e / temporaries (f32)
        acts = 8 * bb * seq * n_qk * 4                   # q, k, v, z (+ copies)
        io = 4 * bb * seq * d_model * itemsize           # double-buffered x, out
        if scores + acts + io <= budget_bytes:
            best = bb
    return best


def attention_forward(x, pos_embed, W_Q, W_K, W_V, W_O, *, block_batch=None):
    """x: (batch, seq, d_model), pos_embed: (seq, d_model),
    W_Q/W_K/W_V: (n_heads, d_head, d_model), W_O: (n_heads, d_model, d_head).
    Returns (batch, seq, d_model) — the use_attn_result=False path (the
    per-head-result branch sums to the same value)."""
    batch, seq, d_model = x.shape
    n_heads, d_head, _ = W_Q.shape
    n_qk = n_heads * d_head
    dt = x.dtype

    # One-time host-side weight prep (plain XLA, outside the kernel):
    #   - transpose so every in-kernel matmul is lane-dense (., K) @ (K, N)
    #   - fold 1/sqrt(d_head) into W_Q (cheaper than scaling activations/scores)
    #   - fuse Q and K into a single (d_model, 2*n_qk) weight
    inv_scale = 1.0 / (float(d_head) ** 0.5)
    wq_t = (W_Q.reshape(n_qk, d_model) * inv_scale).T            # (d_model, n_qk)
    wk_t = W_K.reshape(n_qk, d_model).T
    wqk = jnp.concatenate([wq_t, wk_t], axis=1).astype(dt)       # (d_model, 2*n_qk)
    wv_t = W_V.reshape(n_qk, d_model).T.astype(dt)               # (d_model, n_qk)
    wo_t = jnp.transpose(W_O, (0, 2, 1)).reshape(n_qk, d_model).astype(dt)
    pos = pos_embed.astype(dt)

    if block_batch is None:
        block_batch = _pick_block_batch(batch, seq, d_model, n_heads, d_head,
                                        dt.itemsize)
    Bb = block_batch
    assert batch % Bb == 0, (batch, Bb)
    grid = (batch // Bb,)

    kernel = functools.partial(attention_kernel, n_heads=n_heads, d_head=d_head)

    M_total = batch * seq
    flops = int(2 * M_total * d_model * (2 * n_qk)       # fused Q|K projection
                + 2 * M_total * d_model * n_qk           # V projection
                + 2 * batch * n_heads * seq * seq * d_head   # scores
                + 2 * batch * n_heads * seq * seq * d_head   # attn @ V
                + 2 * M_total * n_qk * d_model)          # output projection
    bytes_accessed = int((2 * batch * seq * d_model + seq * d_model
                          + 4 * n_qk * d_model) * dt.itemsize)
    cost = pl.CostEstimate(flops=flops,
                           transcendentals=int(batch * n_heads * seq * seq),
                           bytes_accessed=bytes_accessed)

    return pl.pallas_call(
        kernel,
        out_shape=jax.ShapeDtypeStruct((batch, seq, d_model), dt),
        grid_spec=pltpu.PrefetchScalarGridSpec(
            num_scalar_prefetch=0,
            grid=grid,
            in_specs=[
                pl.BlockSpec((Bb, seq, d_model), lambda b: (b, 0, 0)),   # x
                pl.BlockSpec((seq, d_model), lambda b: (0, 0)),          # pos
                pl.BlockSpec((d_model, 2 * n_qk), lambda b: (0, 0)),     # [Wq|Wk]^T
                pl.BlockSpec((d_model, n_qk), lambda b: (0, 0)),         # Wv^T
                pl.BlockSpec((n_qk, d_model), lambda b: (0, 0)),         # Wo^T
            ],
            out_specs=pl.BlockSpec((Bb, seq, d_model), lambda b: (b, 0, 0)),
        ),
        compiler_params=pltpu.CompilerParams(
            dimension_semantics=("parallel",),
            # 64 MiB fits all generations (== v7x physical); raise toward
            # 96-112 MiB on v6e for large seq/d_model tiles.
            vmem_limit_bytes=64 * 1024 * 1024,
        ),
        cost_estimate=cost,
    )(x, pos, wqk, wv_t, wo_t)


def attention_reference(x, pos_embed, W_Q, W_K, W_V, W_O):
    """Pure-JAX transcription of the PyTorch forward (use_attn_result=False)."""
    d_head = W_Q.shape[1]
    seq = x.shape[1]
    qk_input = x + pos_embed
    q = jnp.einsum('ihm,bpm->bpih', W_Q, qk_input)
    k = jnp.einsum('ihm,bpm->bpih', W_K, qk_input)
    v = jnp.einsum('ihm,bpm->bpih', W_V, x)
    scores = jnp.einsum('bpih,bqih->bipq', q, k) / (d_head ** 0.5)
    mask = jnp.tril(jnp.ones((seq, seq), dtype=bool))
    scores = jnp.where(mask, scores, IGNORE)
    attn = jax.nn.softmax(scores, axis=-1)
    z = jnp.einsum('bpih,biqp->bqih', v, attn)
    return jnp.einsum('imh,bqih->bqm', W_O, z)


def kaiming_uniform(key, shape, dtype=jnp.float32):
    # nn.init.kaiming_uniform_(t, a=sqrt(5)): bound = 1/sqrt(fan_in),
    # fan_in = prod(shape[1:]) for a >=2-D tensor.
    fan_in = 1
    for s in shape[1:]:
        fan_in *= s
    bound = 1.0 / (fan_in ** 0.5)
    return jax.random.uniform(key, shape, dtype=dtype, minval=-bound, maxval=bound)


if __name__ == "__main__":
    cfg = {'n_heads': 4, 'd_head': 8, 'd_model': 32, 'n_ctx': 16,
           'use_attn_result': False}
    batch, seq = 2, 8

    key = jax.random.PRNGKey(0)
    kq, kk, kv, ko, kx, kp = jax.random.split(key, 6)

    W_Q = kaiming_uniform(kq, (cfg['n_heads'], cfg['d_head'], cfg['d_model']))
    W_K = kaiming_uniform(kk, (cfg['n_heads'], cfg['d_head'], cfg['d_model']))
    W_V = kaiming_uniform(kv, (cfg['n_heads'], cfg['d_head'], cfg['d_model']))
    W_O = kaiming_uniform(ko, (cfg['n_heads'], cfg['d_model'], cfg['d_head']))

    x = jax.random.normal(kx, (batch, seq, cfg['d_model']), jnp.float32)
    pos_embed = jax.random.normal(kp, (seq, cfg['d_model']), jnp.float32)

    out = attention_forward(x, pos_embed, W_Q, W_K, W_V, W_O)
    out = jax.block_until_ready(out)

    ref = attention_reference(x, pos_embed, W_Q, W_K, W_V, W_O)
    assert out.shape == (batch, seq, cfg['d_model']), out.shape
    assert out.dtype == x.dtype
    # Tolerance is relaxed only because of the EUP approximate reciprocal used
    # for the deferred softmax normalization (perf review); everything else is
    # exact f32. Structural bugs would show up as O(0.1-1) errors.
    err = float(jnp.max(jnp.abs(out - ref)))
    assert jnp.allclose(out, ref, atol=1e-2, rtol=1e-2), err

    # TODO(synk): HookPoint hooks are identity in the reference forward and are
    # not represented; the use_attn_result=True per-head-result branch reduces
    # to the same sum and is covered by the single fused output projection.
    print("KERNEL_OK")
</pallas_src>

<mosaic_0001>
module attributes {stable_mosaic.version = 11 : i64} {
  func.func @attention_kernel(%arg0: i32, %arg1: memref<2x8x32xf32, #tpu.memory_space<vmem>>, %arg2: memref<8x32xf32, #tpu.memory_space<vmem>>, %arg3: memref<32x64xf32, #tpu.memory_space<vmem>>, %arg4: memref<32x32xf32, #tpu.memory_space<vmem>>, %arg5: memref<32x32xf32, #tpu.memory_space<vmem>>, %arg6: memref<2x8x32xf32, #tpu.memory_space<vmem>>) attributes {dimension_semantics = [#tpu.dimension_semantics<parallel>], iteration_bounds = array<i64: 1>, scalar_prefetch = 0 : i64, scratch_operands = 0 : i64, tpu.core_type = #tpu.core_type<tc>, window_params = [{transform_indices = @transform_0, window_bounds = array<i64: 2, 8, 32>}, {pipeline_mode = #tpu.pipeline_mode<synchronous>, transform_indices = @transform_1, window_bounds = array<i64: 8, 32>}, {pipeline_mode = #tpu.pipeline_mode<synchronous>, transform_indices = @transform_2, window_bounds = array<i64: 32, 64>}, {pipeline_mode = #tpu.pipeline_mode<synchronous>, transform_indices = @transform_3, window_bounds = array<i64: 32, 32>}, {pipeline_mode = #tpu.pipeline_mode<synchronous>, transform_indices = @transform_4, window_bounds = array<i64: 32, 32>}, {transform_indices = @transform_5, window_bounds = array<i64: 2, 8, 32>}]} {
    %c0 = arith.constant 0 : index
    %c0_0 = arith.constant 0 : index
    %c0_1 = arith.constant 0 : index
    %0 = vector.load %arg1[%c0, %c0_0, %c0_1] : memref<2x8x32xf32, #tpu.memory_space<vmem>>, vector<2x8x32xf32>
    %c0_2 = arith.constant 0 : index
    %c0_3 = arith.constant 0 : index
    %1 = vector.load %arg2[%c0_2, %c0_3] : memref<8x32xf32, #tpu.memory_space<vmem>>, vector<8x32xf32>
    %2 = vector.shape_cast %1 : vector<8x32xf32> to vector<1x8x32xf32>
    %3 = vector.broadcast %2 : vector<1x8x32xf32> to vector<2x8x32xf32>
    %4 = arith.addf %0, %3 : vector<2x8x32xf32>
    %5 = vector.shape_cast %0 : vector<2x8x32xf32> to vector<16x32xf32>
    %6 = vector.shape_cast %4 : vector<2x8x32xf32> to vector<16x32xf32>
    %c0_4 = arith.constant 0 : index
    %c0_5 = arith.constant 0 : index
    %7 = vector.load %arg3[%c0_4, %c0_5] : memref<32x64xf32, #tpu.memory_space<vmem>>, vector<32x64xf32>
    %cst = arith.constant dense<0.000000e+00> : vector<16x64xf32>
    %8 = tpu.matmul %6, %7, %cst {dimension_numbers = #tpu.dot_dimension_numbers<[1], [0], [0], [1], [0, 0, 1, 1], [], []>} : vector<16x32xf32>, vector<32x64xf32>, vector<16x64xf32> -> vector<16x64xf32>
    %c0_6 = arith.constant 0 : index
    %c0_7 = arith.constant 0 : index
    %9 = vector.load %arg4[%c0_6, %c0_7] : memref<32x32xf32, #tpu.memory_space<vmem>>, vector<32x32xf32>
    %cst_8 = arith.constant dense<0.000000e+00> : vector<16x32xf32>
    %10 = tpu.matmul %5, %9, %cst_8 {dimension_numbers = #tpu.dot_dimension_numbers<[1], [0], [0], [1], [0, 0, 1, 1], [], []>} : vector<16x32xf32>, vector<32x32xf32>, vector<16x32xf32> -> vector<16x32xf32>
    %11 = vector.shape_cast %8 : vector<16x64xf32> to vector<2x8x64xf32>
    %12 = tpu.transpose %11, [0, 2, 1] : vector<2x8x64xf32> -> vector<2x64x8xf32>
    %13 = vector.extract_strided_slice %12 {offsets = [0, 0, 0], sizes = [2, 32, 8], strides = [1, 1, 1]} : vector<2x64x8xf32> to vector<2x32x8xf32>
    %14 = vector.shape_cast %13 : vector<2x32x8xf32> to vector<8x8x8xf32>
    %15 = tpu.transpose %14, [0, 2, 1] : vector<8x8x8xf32> -> vector<8x8x8xf32>
    %16 = vector.extract_strided_slice %12 {offsets = [0, 32, 0], sizes = [2, 32, 8], strides = [1, 1, 1]} : vector<2x64x8xf32> to vector<2x32x8xf32>
    %17 = vector.shape_cast %16 : vector<2x32x8xf32> to vector<8x8x8xf32>
    %18 = vector.shape_cast %10 : vector<16x32xf32> to vector<2x8x32xf32>
    %19 = tpu.transpose %18, [0, 2, 1] : vector<2x8x32xf32> -> vector<2x32x8xf32>
    %20 = vector.shape_cast %19 : vector<2x32x8xf32> to vector<8x8x8xf32>
    "tpu.trace_start"() <{level = 10 : i32, message = "bqd,bdk->bqk"}> : () -> ()
    %cst_9 = arith.constant dense<0.000000e+00> : vector<8x8x8xf32>
    %21 = tpu.matmul %15, %17, %cst_9 {dimension_numbers = #tpu.dot_dimension_numbers<[2], [1], [1], [2], [0, 0, 0, 1, 1, 2], [0], [0]>} : vector<8x8x8xf32>, vector<8x8x8xf32>, vector<8x8x8xf32> -> vector<8x8x8xf32>
    "tpu.trace_stop"() : () -> ()
    %22 = tpu.iota {dimensions = array<i32: 1>} : vector<8x8x8xi32>
    %23 = tpu.iota {dimensions = array<i32: 2>} : vector<8x8x8xi32>
    %24 = arith.cmpi sle, %23, %22 : vector<8x8x8xi32>
    %cst_10 = arith.constant -1.000000e+05 : f32
    %25 = vector.broadcast %cst_10 : f32 to vector<8x8x8xf32>
    %26 = arith.select %24, %21, %25 : vector<8x8x8xi1>, vector<8x8x8xf32>
    %cst_11 = arith.constant dense<0xFF800000> : vector<8x8xf32>
    %27 = vector.multi_reduction <maximumf>, %26, %cst_11 [2] : vector<8x8x8xf32> to vector<8x8xf32>
    %28 = vector.shape_cast %27 : vector<8x8xf32> to vector<8x8x1xf32>
    %29 = vector.broadcast %28 : vector<8x8x1xf32> to vector<8x8x8xf32>
    %30 = arith.subf %26, %29 : vector<8x8x8xf32>
    %31 = math.exp %30 : vector<8x8x8xf32>
    %cst_12 = arith.constant dense<0.000000e+00> : vector<8x8xf32>
    %32 = vector.multi_reduction <add>, %31, %cst_12 [2] : vector<8x8x8xf32> to vector<8x8xf32>
    %33 = vector.shape_cast %32 : vector<8x8xf32> to vector<8x8x1xf32>
    "tpu.trace_start"() <{level = 10 : i32, message = "bqk,bdk->bqd"}> : () -> ()
    %cst_13 = arith.constant dense<0.000000e+00> : vector<8x8x8xf32>
    %34 = tpu.matmul %31, %20, %cst_13 {dimension_numbers = #tpu.dot_dimension_numbers<[2], [2], [1], [1], [0, 0, 0, 1, 1, 1], [0], [0]>} : vector<8x8x8xf32>, vector<8x8x8xf32>, vector<8x8x8xf32> -> vector<8x8x8xf32>
    "tpu.trace_stop"() : () -> ()
    %35 = tpu.reciprocal %33 {approx = true} : vector<8x8x1xf32> -> vector<8x8x1xf32>
    %36 = vector.broadcast %35 : vector<8x8x1xf32> to vector<8x8x8xf32>
    %37 = arith.mulf %34, %36 : vector<8x8x8xf32>
    %38 = tpu.transpose %37, [0, 2, 1] : vector<8x8x8xf32> -> vector<8x8x8xf32>
    %39 = vector.shape_cast %38 : vector<8x8x8xf32> to vector<2x32x8xf32>
    %40 = tpu.transpose %39, [0, 2, 1] : vector<2x32x8xf32> -> vector<2x8x32xf32>
    %41 = vector.shape_cast %40 : vector<2x8x32xf32> to vector<16x32xf32>
    %c0_14 = arith.constant 0 : index
    %c0_15 = arith.constant 0 : index
    %42 = vector.load %arg5[%c0_14, %c0_15] : memref<32x32xf32, #tpu.memory_space<vmem>>, vector<32x32xf32>
    %cst_16 = arith.constant dense<0.000000e+00> : vector<16x32xf32>
    %43 = tpu.matmul %41, %42, %cst_16 {dimension_numbers = #tpu.dot_dimension_numbers<[1], [0], [0], [1], [0, 0, 1, 1], [], []>} : vector<16x32xf32>, vector<32x32xf32>, vector<16x32xf32> -> vector<16x32xf32>
    %44 = vector.shape_cast %43 : vector<16x32xf32> to vector<2x8x32xf32>
    %c0_17 = arith.constant 0 : index
    %c0_18 = arith.constant 0 : index
    %c0_19 = arith.constant 0 : index
    %45 = vector.load %arg6[%c0_17, %c0_18, %c0_19] : memref<2x8x32xf32, #tpu.memory_space<vmem>>, vector<2x8x32xf32>
    tpu.vector_store %arg6[%c0_17, %c0_18, %c0_19], %44 {strides = array<i32>} : memref<2x8x32xf32, #tpu.memory_space<vmem>>, vector<2x8x32xf32>,
    return
  }
  func.func @transform_0(%arg0: i32) -> (i32, i32, i32) {
    %c0_i32 = arith.constant 0 : i32
    %c0_i32_0 = arith.constant 0 : i32
    %c0_i32_1 = arith.constant 0 : i32
    return %arg0, %c0_i32, %c0_i32_0 : i32, i32, i32
  }
  func.func @transform_1(%arg0: i32) -> (i32, i32) {
    %c0_i32 = arith.constant 0 : i32
    %c0_i32_0 = arith.constant 0 : i32
    %c0_i32_1 = arith.constant 0 : i32
    return %c0_i32, %c0_i32_0 : i32, i32
  }
  func.func @transform_2(%arg0: i32) -> (i32, i32) {
    %c0_i32 = arith.constant 0 : i32
    %c0_i32_0 = arith.constant 0 : i32
    %c0_i32_1 = arith.constant 0 : i32
    return %c0_i32, %c0_i32_0 : i32, i32
  }
  func.func @transform_3(%arg0: i32) -> (i32, i32) {
    %c0_i32 = arith.constant 0 : i32
    %c0_i32_0 = arith.constant 0 : i32
    %c0_i32_1 = arith.constant 0 : i32
    return %c0_i32, %c0_i32_0 : i32, i32
  }
  func.func @transform_4(%arg0: i32) -> (i32, i32) {
    %c0_i32 = arith.constant 0 : i32
    %c0_i32_0 = arith.constant 0 : i32
    %c0_i32_1 = arith.constant 0 : i32
    return %c0_i32, %c0_i32_0 : i32, i32
  }
  func.func @transform_5(%arg0: i32) -> (i32, i32, i32) {
    %c0_i32 = arith.constant 0 : i32
    %c0_i32_0 = arith.constant 0 : i32
    %c0_i32_1 = arith.constant 0 : i32
    return %arg0, %c0_i32, %c0_i32_0 : i32, i32, i32
  }
}

</mosaic_0001>

<llo_original>
// kernel: tpu_custom_call.1
$region0: #{tpu_custom_call.1}
  #allocation0 [shape = 'u32[]', space=smem, size = 0x4, offset = 0x4, fixed_abs, tag = 'smem constant byte address 0x4 - core index']
  #allocation1 [shape = 'u32[144,128]{1,0:T(1,128)}', space=vmem, size = 0x12000, scoped, tag = 'internal scratch']
  %s0 = inlined_call_operand.hbm [shape: f32[2,8,32], index: 0, kind: input, shape index: {}]
  %s1 = inlined_call_operand.hbm [shape: f32[8,32], index: 1, kind: input, shape index: {}]
  %s2 = inlined_call_operand.hbm [shape: f32[32,64], index: 2, kind: input, shape index: {}]
  %s3 = inlined_call_operand.hbm [shape: f32[32,32], index: 3, kind: input, shape index: {}]
  %s4 = inlined_call_operand.hbm [shape: f32[32,32], index: 4, kind: input, shape index: {}]
  %s5 = inlined_call_operand.hbm [shape: f32[2,8,32], index: 5, kind: output, shape index: {}]
  %s6 = sld [smem:[#allocation0]]
  $region50: #{tpu_custom_call.1} parent=0
    _
  %s8 = ssub.s32 1, %s6
  %s9 = scalar_select 0, %s8, %s6
  $region1: #{tpu_custom_call.1} parent=0
    #allocation2 [shape = 'u8[8192]{0}', space=vmem, size = 0x2000, scoped, tag = 'input window, operand 0, single buffered']
    #allocation3 [shape = 's32[1]{0}', space=sflag, size = 0x4, scoped, tag = 'scoped memory for tpu_custom_call.1']
    #allocation4 [shape = 's32[1]{0}', space=sflag, size = 0x4, scoped, tag = 'scoped memory for tpu_custom_call.1']
    #allocation5 [shape = 'u8[4096]{0}', space=vmem, size = 0x1000, scoped, tag = 'input window, operand 1, single buffered']
    #allocation6 [shape = 's32[1]{0}', space=sflag, size = 0x4, scoped, tag = 'scoped memory for tpu_custom_call.1']
    #allocation7 [shape = 'u8[16384]{0}', space=vmem, size = 0x4000, scoped, tag = 'input window, operand 2, single buffered']
    #allocation8 [shape = 'u8[16384]{0}', space=vmem, size = 0x4000, scoped, tag = 'input window, operand 3, single buffered']
    #allocation9 [shape = 's32[1]{0}', space=sflag, size = 0x4, scoped, tag = 'scoped memory for tpu_custom_call.1']
    #allocation10 [shape = 'u8[16384]{0}', space=vmem, size = 0x4000, scoped, tag = 'input window, operand 4, single buffered']
    #allocation11 [shape = 'u8[8192]{0}', space=vmem, size = 0x2000, scoped, tag = 'output window, operand 0, single buffered']
    %10 = vsyncpa [#allocation3], 0
    %11 = vsyncpa [#allocation6], 0
    %12 = vsyncpa [#allocation9], 0
    %13 = vsyncpa [#allocation4], 0
    // Predicated region
    $region2: #{tpu_custom_call.1} parent=1 // pred_check
      _
    $region3: #{tpu_custom_call.1} parent=1 // pred_check_branch
      %15 = sbr.rel (0) target = $region5
    $region4: #{tpu_custom_call.1} parent=1 // pred_region
      %s17 = ssub.s32 256, 256
      %18 = vsyncadd [#allocation3], %s17
      %s19 = sshll.u32 [#allocation2], 4
      %s20 = int_to_ptr.vmem [resolvable:$true] %s19
      %25 = dma.hbm_to_vmem [thread:$0]  %s0, 256, %s20, [#allocation3], 128, 128, 8
    $region5: #{tpu_custom_call.1} parent=1 // pred_fallthru
      _
    // Predicated region
    $region6: #{tpu_custom_call.1} parent=1 // pred_check
      _
    $region7: #{tpu_custom_call.1} parent=1 // pred_check_branch
      %27 = sbr.rel (0) target = $region9
    $region8: #{tpu_custom_call.1} parent=1 // pred_region
      %s29 = ssub.s32 128, 128
      %30 = vsyncadd [#allocation6], %s29
      %s32 = sshll.u32 [#allocation5], 4
      %s33 = int_to_ptr.vmem [resolvable:$true] %s32
      %35 = dma.hbm_to_vmem [thread:$0]  %s1, 128, %s33, [#allocation6]
    $region9: #{tpu_custom_call.1} parent=1 // pred_fallthru
      _
    // Predicated region
    $region10: #{tpu_custom_call.1} parent=1 // pred_check
      _
    $region11: #{tpu_custom_call.1} parent=1 // pred_check_branch
      %37 = sbr.rel (0) target = $region13
    $region12: #{tpu_custom_call.1} parent=1 // pred_region
      %s39 = ssub.s32 512, 512
      %40 = vsyncadd [#allocation6], %s39
      %s41 = sshll.u32 [#allocation7], 4
      %s42 = int_to_ptr.vmem [resolvable:$true] %s41
      %47 = dma.hbm_to_vmem [thread:$0]  %s2, 512, %s42, [#allocation6], 128, 128, 8
    $region13: #{tpu_custom_call.1} parent=1 // pred_fallthru
      _
    // Predicated region
    $region14: #{tpu_custom_call.1} parent=1 // pred_check
      _
    $region15: #{tpu_custom_call.1} parent=1 // pred_check_branch
      %49 = sbr.rel (0) target = $region17
    $region16: #{tpu_custom_call.1} parent=1 // pred_region
      %s51 = ssub.s32 512, 512
      %52 = vsyncadd [#allocation9], %s51
      %s53 = sshll.u32 [#allocation8], 4
      %s54 = int_to_ptr.vmem [resolvable:$true] %s53
      %59 = dma.hbm_to_vmem [thread:$0]  %s3, 512, %s54, [#allocation9], 128, 128, 8
    $region17: #{tpu_custom_call.1} parent=1 // pred_fallthru
      _
    // Predicated region
    $region18: #{tpu_custom_call.1} parent=1 // pred_check
      _
    $region19: #{tpu_custom_call.1} parent=1 // pred_check_branch
      %61 = sbr.rel (0) target = $region21
    $region20: #{tpu_custom_call.1} parent=1 // pred_region
      %s63 = ssub.s32 512, 512
      %64 = vsyncadd [#allocation9], %s63
      %s65 = sshll.u32 [#allocation10], 4
      %s66 = int_to_ptr.vmem [resolvable:$true] %s65
      %71 = dma.hbm_to_vmem [thread:$0]  %s4, 512, %s66, [#allocation9], 128, 128, 8
    $region21: #{tpu_custom_call.1} parent=1 // pred_fallthru
      _
    // Predicated region
    $region22: #{tpu_custom_call.1} parent=1 // pred_check
      _
    $region23: #{tpu_custom_call.1} parent=1 // pred_check_branch
      %73 = sbr.rel (0) target = $region25
    $region24: #{tpu_custom_call.1} parent=1 // pred_region
      %74 = dma.done [#allocation3], 256
    $region25: #{tpu_custom_call.1} parent=1 // pred_fallthru
      _
    // Predicated region
    $region26: #{tpu_custom_call.1} parent=1 // pred_check
      _
    $region27: #{tpu_custom_call.1} parent=1 // pred_check_branch
      %76 = sbr.rel (0) target = $region29
    $region28: #{tpu_custom_call.1} parent=1 // pred_region
      %77 = dma.done [#allocation6], 128
    $region29: #{tpu_custom_call.1} parent=1 // pred_fallthru
      _
    // Predicated region
    $region30: #{tpu_custom_call.1} parent=1 // pred_check
      _
    $region31: #{tpu_custom_call.1} parent=1 // pred_check_branch
      %79 = sbr.rel (0) target = $region33
    $region32: #{tpu_custom_call.1} parent=1 // pred_region
      %80 = dma.done [#allocation6], 512
    $region33: #{tpu_custom_call.1} parent=1 // pred_fallthru
      _
    // Predicated region
    $region34: #{tpu_custom_call.1} parent=1 // pred_check
      _
    $region35: #{tpu_custom_call.1} parent=1 // pred_check_branch
      %82 = sbr.rel (0) target = $region37
    $region36: #{tpu_custom_call.1} parent=1 // pred_region
      %83 = dma.done [#allocation9], 512
    $region37: #{tpu_custom_call.1} parent=1 // pred_fallthru
      _
    // Predicated region
    $region38: #{tpu_custom_call.1} parent=1 // pred_check
      _
    $region39: #{tpu_custom_call.1} parent=1 // pred_check_branch
      %85 = sbr.rel (0) target = $region41
    $region40: #{tpu_custom_call.1} parent=1 // pred_region
      %86 = dma.done [#allocation9], 512
    $region41: #{tpu_custom_call.1} parent=1 // pred_fallthru
      _
    %v87 = vld [vmem:[#allocation2] sm:$0xff]
    %v88 = vld [vmem:[#allocation2 + $0x8] sm:$0xff]
    %v89 = vld [vmem:[#allocation5] sm:$0xff]
    %v90 = vadd.f32 %v87, %v89
    %v91 = vadd.f32 %v88, %v89
    %v92 = vld [vmem:[#allocation7] sm:$0xff]
    %v93 = vld [vmem:[#allocation7 + $0x8] sm:$0xff]
    %v94 = vld [vmem:[#allocation7 + $0x10] sm:$0xff]
    %v95 = vld [vmem:[#allocation7 + $0x18] sm:$0xff]
    %vm96 = vcmask 261120
    %v98 = vsel %vm96, %v90, 0
    %v101 = vsel %vm96, %v91, 0
    %103 = vmatprep.subr.mxu0 0.0
    %104 = vmatpush1.msra.mxu0 %v92
    %105 = vmatprep.subr.mxu0 0.0
    %106 = vmatpush1.msra.mxu0 %v93
    %107 = vmatprep.subr.mxu0 0.0
    %108 = vmatpush1.msra.mxu0 %v94
    %109 = vmatprep.subr.mxu0 0.0
    %110 = vmatpush1.msra.mxu0 %v95
    %111 = vmatprep.subr.mxu0 0.0
    %112 = vmatpush1.msra.mxu0 0.0
    %113 = vmatprep.subr.mxu0 0.0
    %114 = vmatpush1.msra.mxu0 0.0
    %115 = vmatprep.subr.mxu0 0.0
    %116 = vmatpush1.msra.mxu0 0.0
    %117 = vmatprep.subr.mxu0 0.0
    %118 = vmatpush1.msra.mxu0 0.0
    %119 = vmatprep.subr.mxu0 0.0
    %120 = vmatpush1.msra.mxu0 0.0
    %121 = vmatprep.subr.mxu0 0.0
    %122 = vmatpush1.msra.mxu0 0.0
    %123 = vmatprep.subr.mxu0 0.0
    %124 = vmatpush1.msra.mxu0 0.0
    %125 = vmatprep.subr.mxu0 0.0
    %126 = vmatpush1.msra.mxu0 0.0
    %127 = vmatprep.subr.mxu0 0.0
    %128 = vmatpush1.msra.mxu0 0.0
    %129 = vmatprep.subr.mxu0 0.0
    %130 = vmatpush1.msra.mxu0 0.0
    %131 = vmatprep.subr.mxu0 0.0
    %132 = vmatpush1.msra.mxu0 0.0
    %133 = vmatprep.subr.mxu0 0.0
    %134 = vmatpush1.msra.mxu0 0.0
    %135 = vmatprep.subr.mxu0 0.0
    %136 = vmatpush1.msra.mxu0 0.0
    %137 = vmatprep.subr.mxu0 0.0
    %138 = vmatpush1.msra.mxu0 0.0
    %139 = vmatprep.subr.mxu0 0.0
    %140 = vmatpush1.msra.mxu0 0.0
    %141 = vmatprep.subr.mxu0 0.0
    %142 = vmatpush1.msra.mxu0 0.0
    %143 = vmatprep.subr.mxu0 0.0
    %144 = vmatpush1.msra.mxu0 0.0
    %145 = vmatprep.subr.mxu0 0.0
    %146 = vmatpush1.msra.mxu0 0.0
    %147 = vmatprep.subr.mxu0 0.0
    %148 = vmatpush1.msra.mxu0 0.0
    %149 = vmatprep.subr.mxu0 0.0
    %150 = vmatpush1.msra.mxu0 0.0
    %151 = vmatprep.subr.mxu0 0.0
    %152 = vmatpush1.msra.mxu0 0.0
    %153 = vmatprep.subr.mxu0 0.0
    %154 = vmatpush1.msra.mxu0 0.0
    %155 = vmatprep.subr.mxu0 0.0
    %156 = vmatpush1.msra.mxu0 0.0
    %157 = vmatprep.subr.mxu0 0.0
    %158 = vmatpush1.msra.mxu0 0.0
    %159 = vmatprep.subr.mxu0 0.0
    %160 = vmatpush1.msra.mxu0 0.0
    %161 = vmatprep.subr.mxu0 0.0
    %162 = vmatpush1.msra.mxu0 0.0
    %163 = vmatprep.subr.mxu0 0.0
    %164 = vmatpush1.msra.mxu0 0.0
    %165 = vmatprep.subr.mxu0 0.0
    %166 = vmatpush1.msra.mxu0 0.0
    %167 = vmatprep.mubr.f32.mxu0 0.0
    %168 = vmatmul.mubr.f32.gmra.mrb[0].mxu0 %v98
    %v169 = vpop.f32.mrb[0].mxu0
    %v170 = vadd.f32 0.0, %v169
    %v171 = vpop.f32.mrb[0].mxu0
    %172 = vmatprep.mubr.f32.mxu0 0.0
    %173 = vmatmul.mubr.f32.gmra.mrb[0].mxu0 %v101
    %v174 = vpop.f32.mrb[0].mxu0
    %v175 = vadd.f32 0.0, %v174
    %v176 = vpop.f32.mrb[0].mxu0
    %177 = vdwg.mxu0
    %v178 = vld [vmem:[#allocation8] sm:$0xff]
    %v179 = vld [vmem:[#allocation8 + $0x8] sm:$0xff]
    %v180 = vld [vmem:[#allocation8 + $0x10] sm:$0xff]
    %v181 = vld [vmem:[#allocation8 + $0x18] sm:$0xff]
    %v183 = vsel %vm96, %v87, 0
    %v186 = vsel %vm96, %v88, 0
    %188 = vmatprep.subr.mxu0 0.0
    %189 = vmatpush1.msra.mxu0 %v178
    %190 = vmatprep.subr.mxu0 0.0
    %191 = vmatpush1.msra.mxu0 %v179
    %192 = vmatprep.subr.mxu0 0.0
    %193 = vmatpush1.msra.mxu0 %v180
    %194 = vmatprep.subr.mxu0 0.0
    %195 = vmatpush1.msra.mxu0 %v181
    %196 = vmatprep.subr.mxu0 0.0
    %197 = vmatpush1.msra.mxu0 0.0
    %198 = vmatprep.subr.mxu0 0.0
    %199 = vmatpush1.msra.mxu0 0.0
    %200 = vmatprep.subr.mxu0 0.0
    %201 = vmatpush1.msra.mxu0 0.0
    %202 = vmatprep.subr.mxu0 0.0
    %203 = vmatpush1.msra.mxu0 0.0
    %204 = vmatprep.subr.mxu0 0.0
    %205 = vmatpush1.msra.mxu0 0.0
    %206 = vmatprep.subr.mxu0 0.0
    %207 = vmatpush1.msra.mxu0 0.0
    %208 = vmatprep.subr.mxu0 0.0
    %209 = vmatpush1.msra.mxu0 0.0
    %210 = vmatprep.subr.mxu0 0.0
    %211 = vmatpush1.msra.mxu0 0.0
    %212 = vmatprep.subr.mxu0 0.0
    %213 = vmatpush1.msra.mxu0 0.0
    %214 = vmatprep.subr.mxu0 0.0
    %215 = vmatpush1.msra.mxu0 0.0
    %216 = vmatprep.subr.mxu0 0.0
    %217 = vmatpush1.msra.mxu0 0.0
    %218 = vmatprep.subr.mxu0 0.0
    %219 = vmatpush1.msra.mxu0 0.0
    %220 = vmatprep.subr.mxu0 0.0
    %221 = vmatpush1.msra.mxu0 0.0
    %222 = vmatprep.subr.mxu0 0.0
    %223 = vmatpush1.msra.mxu0 0.0
    %224 = vmatprep.subr.mxu0 0.0
    %225 = vmatpush1.msra.mxu0 0.0
    %226 = vmatprep.subr.mxu0 0.0
    %227 = vmatpush1.msra.mxu0 0.0
    %228 = vmatprep.subr.mxu0 0.0
    %229 = vmatpush1.msra.mxu0 0.0
    %230 = vmatprep.subr.mxu0 0.0
    %231 = vmatpush1.msra.mxu0 0.0
    %232 = vmatprep.subr.mxu0 0.0
    %233 = vmatpush1.msra.mxu0 0.0
    %234 = vmatprep.subr.mxu0 0.0
    %235 = vmatpush1.msra.mxu0 0.0
    %236 = vmatprep.subr.mxu0 0.0
    %237 = vmatpush1.msra.mxu0 0.0
    %238 = vmatprep.subr.mxu0 0.0
    %239 = vmatpush1.msra.mxu0 0.0
    %240 = vmatprep.subr.mxu0 0.0
    %241 = vmatpush1.msra.mxu0 0.0
    %242 = vmatprep.subr.mxu0 0.0
    %243 = vmatpush1.msra.mxu0 0.0
    %244 = vmatprep.subr.mxu0 0.0
    %245 = vmatpush1.msra.mxu0 0.0
    %246 = vmatprep.subr.mxu0 0.0
    %247 = vmatpush1.msra.mxu0 0.0
    %248 = vmatprep.subr.mxu0 0.0
    %249 = vmatpush1.msra.mxu0 0.0
    %250 = vmatprep.subr.mxu0 0.0
    %251 = vmatpush1.msra.mxu0 0.0
    %252 = vmatprep.mubr.f32.mxu0 0.0
    %253 = vmatmul.mubr.f32.gmra.mrb[0].mxu0 %v183
    %v254 = vpop.f32.mrb[0].mxu0
    %v255 = vadd.f32 0.0, %v254
    %v256 = vpop.f32.mrb[0].mxu0
    %257 = vmatprep.mubr.f32.mxu0 0.0
    %258 = vmatmul.mubr.f32.gmra.mrb[0].mxu0 %v186
    %v259 = vpop.f32.mrb[0].mxu0
    %v260 = vadd.f32 0.0, %v259
    %v261 = vpop.f32.mrb[0].mxu0
    %262 = vdwg.mxu0
    %263 = vxpose.xlu0.b32.start [1/16] %v170, 128
    %264 = vxpose.xlu0.b32.cont [2/16] 0.0, 128
    %265 = vxpose.xlu0.b32.cont [3/16] 0.0, 128
    %266 = vxpose.xlu0.b32.cont [4/16] 0.0, 128
    %267 = vxpose.xlu0.b32.cont [5/16] 0.0, 128
    %268 = vxpose.xlu0.b32.cont [6/16] 0.0, 128
    %269 = vxpose.xlu0.b32.cont [7/16] 0.0, 128
    %270 = vxpose.xlu0.b32.cont [8/16] 0.0, 128
    %271 = vxpose.xlu0.b32.cont [9/16] 0.0, 128
    %272 = vxpose.xlu0.b32.cont [10/16] 0.0, 128
    %273 = vxpose.xlu0.b32.cont [11/16] 0.0, 128
    %274 = vxpose.xlu0.b32.cont [12/16] 0.0, 128
    %275 = vxpose.xlu0.b32.cont [13/16] 0.0, 128
    %276 = vxpose.xlu0.b32.cont [14/16] 0.0, 128
    %277 = vxpose.xlu0.b32.cont [15/16] 0.0, 128
    %278 = vxpose.xlu0.b32.end [16/16] 0.0, 128
    %v279 = vpop.trf.xlu0
    %v280 = vpop.trf.xlu0
    %v281 = vpop.trf.xlu0
    %v282 = vpop.trf.xlu0
    %v283 = vpop.trf.xlu0
    %v284 = vpop.trf.xlu0
    %v285 = vpop.trf.xlu0
    %v286 = vpop.trf.xlu0
    %v287 = vpop.trf.xlu0
    %v288 = vpop.trf.xlu0
    %v289 = vpop.trf.xlu0
    %v290 = vpop.trf.xlu0
    %v291 = vpop.trf.xlu0
    %v292 = vpop.trf.xlu0
    %v293 = vpop.trf.xlu0
    %v294 = vpop.trf.xlu0
    %295 = vxpose.xlu0.b32.start [1/16] %v175, 128
    %296 = vxpose.xlu0.b32.cont [2/16] 0.0, 128
    %297 = vxpose.xlu0.b32.cont [3/16] 0.0, 128
    %298 = vxpose.xlu0.b32.cont [4/16] 0.0, 128
    %299 = vxpose.xlu0.b32.cont [5/16] 0.0, 128
    %300 = vxpose.xlu0.b32.cont [6/16] 0.0, 128
    %301 = vxpose.xlu0.b32.cont [7/16] 0.0, 128
    %302 = vxpose.xlu0.b32.cont [8/16] 0.0, 128
    %303 = vxpose.xlu0.b32.cont [9/16] 0.0, 128
    %304 = vxpose.xlu0.b32.cont [10/16] 0.0, 128
    %305 = vxpose.xlu0.b32.cont [11/16] 0.0, 128
    %306 = vxpose.xlu0.b32.cont [12/16] 0.0, 128
    %307 = vxpose.xlu0.b32.cont [13/16] 0.0, 128
    %308 = vxpose.xlu0.b32.cont [14/16] 0.0, 128
    %309 = vxpose.xlu0.b32.cont [15/16] 0.0, 128
    %310 = vxpose.xlu0.b32.end [16/16] 0.0, 128
    %v311 = vpop.trf.xlu0
    %v312 = vpop.trf.xlu0
    %v313 = vpop.trf.xlu0
    %v314 = vpop.trf.xlu0
    %v315 = vpop.trf.xlu0
    %v316 = vpop.trf.xlu0
    %v317 = vpop.trf.xlu0
    %v318 = vpop.trf.xlu0
    %v319 = vpop.trf.xlu0
    %v320 = vpop.trf.xlu0
    %v321 = vpop.trf.xlu0
    %v322 = vpop.trf.xlu0
    %v323 = vpop.trf.xlu0
    %v324 = vpop.trf.xlu0
    %v325 = vpop.trf.xlu0
    %v326 = vpop.trf.xlu0
    %327 = vxpose.xlu0.b32.start [1/16] %v279, 128
    %328 = vxpose.xlu0.b32.cont [2/16] 0.0, 128
    %329 = vxpose.xlu0.b32.cont [3/16] 0.0, 128
    %330 = vxpose.xlu0.b32.cont [4/16] 0.0, 128
    %331 = vxpose.xlu0.b32.cont [5/16] 0.0, 128
    %332 = vxpose.xlu0.b32.cont [6/16] 0.0, 128
    %333 = vxpose.xlu0.b32.cont [7/16] 0.0, 128
    %334 = vxpose.xlu0.b32.cont [8/16] 0.0, 128
    %335 = vxpose.xlu0.b32.cont [9/16] 0.0, 128
    %336 = vxpose.xlu0.b32.cont [10/16] 0.0, 128
    %337 = vxpose.xlu0.b32.cont [11/16] 0.0, 128
    %338 = vxpose.xlu0.b32.cont [12/16] 0.0, 128
    %339 = vxpose.xlu0.b32.cont [13/16] 0.0, 128
    %340 = vxpose.xlu0.b32.cont [14/16] 0.0, 128
    %341 = vxpose.xlu0.b32.cont [15/16] 0.0, 128
    %342 = vxpose.xlu0.b32.end [16/16] 0.0, 128
    %v343 = vpop.trf.xlu0
    %v344 = vpop.trf.xlu0
    %v345 = vpop.trf.xlu0
    %v346 = vpop.trf.xlu0
    %v347 = vpop.trf.xlu0
    %v348 = vpop.trf.xlu0
    %v349 = vpop.trf.xlu0
    %v350 = vpop.trf.xlu0
    %v351 = vpop.trf.xlu0
    %v352 = vpop.trf.xlu0
    %v353 = vpop.trf.xlu0
    %v354 = vpop.trf.xlu0
    %v355 = vpop.trf.xlu0
    %v356 = vpop.trf.xlu0
    %v357 = vpop.trf.xlu0
    %v358 = vpop.trf.xlu0
    %359 = vxpose.xlu0.b32.start [1/16] %v280, 128
    %360 = vxpose.xlu0.b32.cont [2/16] 0.0, 128
    %361 = vxpose.xlu0.b32.cont [3/16] 0.0, 128
    %362 = vxpose.xlu0.b32.cont [4/16] 0.0, 128
    %363 = vxpose.xlu0.b32.cont [5/16] 0.0, 128
    %364 = vxpose.xlu0.b32.cont [6/16] 0.0, 128
    %365 = vxpose.xlu0.b32.cont [7/16] 0.0, 128
    %366 = vxpose.xlu0.b32.cont [8/16] 0.0, 128
    %367 = vxpose.xlu0.b32.cont [9/16] 0.0, 128
    %368 = vxpose.xlu0.b32.cont [10/16] 0.0, 128
    %369 = vxpose.xlu0.b32.cont [11/16] 0.0, 128
    %370 = vxpose.xlu0.b32.cont [12/16] 0.0, 128
    %371 = vxpose.xlu0.b32.cont [13/16] 0.0, 128
    %372 = vxpose.xlu0.b32.cont [14/16] 0.0, 128
    %373 = vxpose.xlu0.b32.cont [15/16] 0.0, 128
    %374 = vxpose.xlu0.b32.end [16/16] 0.0, 128
    %v375 = vpop.trf.xlu0
    %v376 = vpop.trf.xlu0
    %v377 = vpop.trf.xlu0
    %v378 = vpop.trf.xlu0
    %v379 = vpop.trf.xlu0
    %v380 = vpop.trf.xlu0
    %v381 = vpop.trf.xlu0
    %v382 = vpop.trf.xlu0
    %v383 = vpop.trf.xlu0
    %v384 = vpop.trf.xlu0
    %v385 = vpop.trf.xlu0
    %v386 = vpop.trf.xlu0
    %v387 = vpop.trf.xlu0
    %v388 = vpop.trf.xlu0
    %v389 = vpop.trf.xlu0
    %v390 = vpop.trf.xlu0
    %391 = vxpose.xlu0.b32.start [1/16] %v281, 128
    %392 = vxpose.xlu0.b32.cont [2/16] 0.0, 128
    %393 = vxpose.xlu0.b32.cont [3/16] 0.0, 128
    %394 = vxpose.xlu0.b32.cont [4/16] 0.0, 128
    %395 = vxpose.xlu0.b32.cont [5/16] 0.0, 128
    %396 = vxpose.xlu0.b32.cont [6/16] 0.0, 128
    %397 = vxpose.xlu0.b32.cont [7/16] 0.0, 128
    %398 = vxpose.xlu0.b32.cont [8/16] 0.0, 128
    %399 = vxpose.xlu0.b32.cont [9/16] 0.0, 128
    %400 = vxpose.xlu0.b32.cont [10/16] 0.0, 128
    %401 = vxpose.xlu0.b32.cont [11/16] 0.0, 128
    %402 = vxpose.xlu0.b32.cont [12/16] 0.0, 128
    %403 = vxpose.xlu0.b32.cont [13/16] 0.0, 128
    %404 = vxpose.xlu0.b32.cont [14/16] 0.0, 128
    %405 = vxpose.xlu0.b32.cont [15/16] 0.0, 128
    %406 = vxpose.xlu0.b32.end [16/16] 0.0, 128
    %v407 = vpop.trf.xlu0
    %v408 = vpop.trf.xlu0
    %v409 = vpop.trf.xlu0
    %v410 = vpop.trf.xlu0
    %v411 = vpop.trf.xlu0
    %v412 = vpop.trf.xlu0
    %v413 = vpop.trf.xlu0
    %v414 = vpop.trf.xlu0
    %v415 = vpop.trf.xlu0
    %v416 = vpop.trf.xlu0
    %v417 = vpop.trf.xlu0
    %v418 = vpop.trf.xlu0
    %v419 = vpop.trf.xlu0
    %v420 = vpop.trf.xlu0
    %v421 = vpop.trf.xlu0
    %v422 = vpop.trf.xlu0
    %423 = vxpose.xlu0.b32.start [1/16] %v282, 128
    %424 = vxpose.xlu0.b32.cont [2/16] 0.0, 128
    %425 = vxpose.xlu0.b32.cont [3/16] 0.0, 128
    %426 = vxpose.xlu0.b32.cont [4/16] 0.0, 128
    %427 = vxpose.xlu0.b32.cont [5/16] 0.0, 128
    %428 = vxpose.xlu0.b32.cont [6/16] 0.0, 128
    %429 = vxpose.xlu0.b32.cont [7/16] 0.0, 128
    %430 = vxpose.xlu0.b32.cont [8/16] 0.0, 128
    %431 = vxpose.xlu0.b32.cont [9/16] 0.0, 128
    %432 = vxpose.xlu0.b32.cont [10/16] 0.0, 128
    %433 = vxpose.xlu0.b32.cont [11/16] 0.0, 128
    %434 = vxpose.xlu0.b32.cont [12/16] 0.0, 128
    %435 = vxpose.xlu0.b32.cont [13/16] 0.0, 128
    %436 = vxpose.xlu0.b32.cont [14/16] 0.0, 128
    %437 = vxpose.xlu0.b32.cont [15/16] 0.0, 128
    %438 = vxpose.xlu0.b32.end [16/16] 0.0, 128
    %v439 = vpop.trf.xlu0
    %v440 = vpop.trf.xlu0
    %v441 = vpop.trf.xlu0
    %v442 = vpop.trf.xlu0
    %v443 = vpop.trf.xlu0
    %v444 = vpop.trf.xlu0
    %v445 = vpop.trf.xlu0
    %v446 = vpop.trf.xlu0
    %v447 = vpop.trf.xlu0
    %v448 = vpop.trf.xlu0
    %v449 = vpop.trf.xlu0
    %v450 = vpop.trf.xlu0
    %v451 = vpop.trf.xlu0
    %v452 = vpop.trf.xlu0
    %v453 = vpop.trf.xlu0
    %v454 = vpop.trf.xlu0
    %455 = vxpose.xlu0.b32.start [1/16] %v311, 128
    %456 = vxpose.xlu0.b32.cont [2/16] 0.0, 128
    %457 = vxpose.xlu0.b32.cont [3/16] 0.0, 128
    %458 = vxpose.xlu0.b32.cont [4/16] 0.0, 128
    %459 = vxpose.xlu0.b32.cont [5/16] 0.0, 128
    %460 = vxpose.xlu0.b32.cont [6/16] 0.0, 128
    %461 = vxpose.xlu0.b32.cont [7/16] 0.0, 128
    %462 = vxpose.xlu0.b32.cont [8/16] 0.0, 128
    %463 = vxpose.xlu0.b32.cont [9/16] 0.0, 128
    %464 = vxpose.xlu0.b32.cont [10/16] 0.0, 128
    %465 = vxpose.xlu0.b32.cont [11/16] 0.0, 128
    %466 = vxpose.xlu0.b32.cont [12/16] 0.0, 128
    %467 = vxpose.xlu0.b32.cont [13/16] 0.0, 128
    %468 = vxpose.xlu0.b32.cont [14/16] 0.0, 128
    %469 = vxpose.xlu0.b32.cont [15/16] 0.0, 128
    %470 = vxpose.xlu0.b32.end [16/16] 0.0, 128
    %v471 = vpop.trf.xlu0
    %v472 = vpop.trf.xlu0
    %v473 = vpop.trf.xlu0
    %v474 = vpop.trf.xlu0
    %v475 = vpop.trf.xlu0
    %v476 = vpop.trf.xlu0
    %v477 = vpop.trf.xlu0
    %v478 = vpop.trf.xlu0
    %v479 = vpop.trf.xlu0
    %v480 = vpop.trf.xlu0
    %v481 = vpop.trf.xlu0
    %v482 = vpop.trf.xlu0
    %v483 = vpop.trf.xlu0
    %v484 = vpop.trf.xlu0
    %v485 = vpop.trf.xlu0
    %v486 = vpop.trf.xlu0
    %487 = vxpose.xlu0.b32.start [1/16] %v312, 128
    %488 = vxpose.xlu0.b32.cont [2/16] 0.0, 128
    %489 = vxpose.xlu0.b32.cont [3/16] 0.0, 128
    %490 = vxpose.xlu0.b32.cont [4/16] 0.0, 128
    %491 = vxpose.xlu0.b32.cont [5/16] 0.0, 128
    %492 = vxpose.xlu0.b32.cont [6/16] 0.0, 128
    %493 = vxpose.xlu0.b32.cont [7/16] 0.0, 128
    %494 = vxpose.xlu0.b32.cont [8/16] 0.0, 128
    %495 = vxpose.xlu0.b32.cont [9/16] 0.0, 128
    %496 = vxpose.xlu0.b32.cont [10/16] 0.0, 128
    %497 = vxpose.xlu0.b32.cont [11/16] 0.0, 128
    %498 = vxpose.xlu0.b32.cont [12/16] 0.0, 128
    %499 = vxpose.xlu0.b32.cont [13/16] 0.0, 128
    %500 = vxpose.xlu0.b32.cont [14/16] 0.0, 128
    %501 = vxpose.xlu0.b32.cont [15/16] 0.0, 128
    %502 = vxpose.xlu0.b32.end [16/16] 0.0, 128
    %v503 = vpop.trf.xlu0
    %v504 = vpop.trf.xlu0
    %v505 = vpop.trf.xlu0
    %v506 = vpop.trf.xlu0
    %v507 = vpop.trf.xlu0
    %v508 = vpop.trf.xlu0
    %v509 = vpop.trf.xlu0
    %v510 = vpop.trf.xlu0
    %v511 = vpop.trf.xlu0
    %v512 = vpop.trf.xlu0
    %v513 = vpop.trf.xlu0
    %v514 = vpop.trf.xlu0
    %v515 = vpop.trf.xlu0
    %v516 = vpop.trf.xlu0
    %v517 = vpop.trf.xlu0
    %v518 = vpop.trf.xlu0
    %519 = vxpose.xlu0.b32.start [1/16] %v313, 128
    %520 = vxpose.xlu0.b32.cont [2/16] 0.0, 128
    %521 = vxpose.xlu0.b32.cont [3/16] 0.0, 128
    %522 = vxpose.xlu0.b32.cont [4/16] 0.0, 128
    %523 = vxpose.xlu0.b32.cont [5/16] 0.0, 128
    %524 = vxpose.xlu0.b32.cont [6/16] 0.0, 128
    %525 = vxpose.xlu0.b32.cont [7/16] 0.0, 128
    %526 = vxpose.xlu0.b32.cont [8/16] 0.0, 128
    %527 = vxpose.xlu0.b32.cont [9/16] 0.0, 128
    %528 = vxpose.xlu0.b32.cont [10/16] 0.0, 128
    %529 = vxpose.xlu0.b32.cont [11/16] 0.0, 128
    %530 = vxpose.xlu0.b32.cont [12/16] 0.0, 128
    %531 = vxpose.xlu0.b32.cont [13/16] 0.0, 128
    %532 = vxpose.xlu0.b32.cont [14/16] 0.0, 128
    %533 = vxpose.xlu0.b32.cont [15/16] 0.0, 128
    %534 = vxpose.xlu0.b32.end [16/16] 0.0, 128
    %v535 = vpop.trf.xlu0
    %v536 = vpop.trf.xlu0
    %v537 = vpop.trf.xlu0
    %v538 = vpop.trf.xlu0
    %v539 = vpop.trf.xlu0
    %v540 = vpop.trf.xlu0
    %v541 = vpop.trf.xlu0
    %v542 = vpop.trf.xlu0
    %v543 = vpop.trf.xlu0
    %v544 = vpop.trf.xlu0
    %v545 = vpop.trf.xlu0
    %v546 = vpop.trf.xlu0
    %v547 = vpop.trf.xlu0
    %v548 = vpop.trf.xlu0
    %v549 = vpop.trf.xlu0
    %v550 = vpop.trf.xlu0
    %551 = vxpose.xlu0.b32.start [1/16] %v314, 128
    %552 = vxpose.xlu0.b32.cont [2/16] 0.0, 128
    %553 = vxpose.xlu0.b32.cont [3/16] 0.0, 128
    %554 = vxpose.xlu0.b32.cont [4/16] 0.0, 128
    %555 = vxpose.xlu0.b32.cont [5/16] 0.0, 128
    %556 = vxpose.xlu0.b32.cont [6/16] 0.0, 128
    %557 = vxpose.xlu0.b32.cont [7/16] 0.0, 128
    %558 = vxpose.xlu0.b32.cont [8/16] 0.0, 128
    %559 = vxpose.xlu0.b32.cont [9/16] 0.0, 128
    %560 = vxpose.xlu0.b32.cont [10/16] 0.0, 128
    %561 = vxpose.xlu0.b32.cont [11/16] 0.0, 128
    %562 = vxpose.xlu0.b32.cont [12/16] 0.0, 128
    %563 = vxpose.xlu0.b32.cont [13/16] 0.0, 128
    %564 = vxpose.xlu0.b32.cont [14/16] 0.0, 128
    %565 = vxpose.xlu0.b32.cont [15/16] 0.0, 128
    %566 = vxpose.xlu0.b32.end [16/16] 0.0, 128
    %v567 = vpop.trf.xlu0
    %v568 = vpop.trf.xlu0
    %v569 = vpop.trf.xlu0
    %v570 = vpop.trf.xlu0
    %v571 = vpop.trf.xlu0
    %v572 = vpop.trf.xlu0
    %v573 = vpop.trf.xlu0
    %v574 = vpop.trf.xlu0
    %v575 = vpop.trf.xlu0
    %v576 = vpop.trf.xlu0
    %v577 = vpop.trf.xlu0
    %v578 = vpop.trf.xlu0
    %v579 = vpop.trf.xlu0
    %v580 = vpop.trf.xlu0
    %v581 = vpop.trf.xlu0
    %v582 = vpop.trf.xlu0
    %583 = vxpose.xlu0.b32.start [1/16] %v255, 128
    %584 = vxpose.xlu0.b32.cont [2/16] 0.0, 128
    %585 = vxpose.xlu0.b32.cont [3/16] 0.0, 128
    %586 = vxpose.xlu0.b32.cont [4/16] 0.0, 128
    %587 = vxpose.xlu0.b32.cont [5/16] 0.0, 128
    %588 = vxpose.xlu0.b32.cont [6/16] 0.0, 128
    %589 = vxpose.xlu0.b32.cont [7/16] 0.0, 128
    %590 = vxpose.xlu0.b32.cont [8/16] 0.0, 128
    %591 = vxpose.xlu0.b32.cont [9/16] 0.0, 128
    %592 = vxpose.xlu0.b32.cont [10/16] 0.0, 128
    %593 = vxpose.xlu0.b32.cont [11/16] 0.0, 128
    %594 = vxpose.xlu0.b32.cont [12/16] 0.0, 128
    %595 = vxpose.xlu0.b32.cont [13/16] 0.0, 128
    %596 = vxpose.xlu0.b32.cont [14/16] 0.0, 128
    %597 = vxpose.xlu0.b32.cont [15/16] 0.0, 128
    %598 = vxpose.xlu0.b32.end [16/16] 0.0, 128
    %v599 = vpop.trf.xlu0
    %v600 = vpop.trf.xlu0
    %v601 = vpop.trf.xlu0
    %v602 = vpop.trf.xlu0
    %v603 = vpop.trf.xlu0
    %v604 = vpop.trf.xlu0
    %v605 = vpop.trf.xlu0
    %v606 = vpop.trf.xlu0
    %v607 = vpop.trf.xlu0
    %v608 = vpop.trf.xlu0
    %v609 = vpop.trf.xlu0
    %v610 = vpop.trf.xlu0
    %v611 = vpop.trf.xlu0
    %v612 = vpop.trf.xlu0
    %v613 = vpop.trf.xlu0
    %v614 = vpop.trf.xlu0
    %615 = vxpose.xlu0.b32.start [1/16] %v260, 128
    %616 = vxpose.xlu0.b32.cont [2/16] 0.0, 128
    %617 = vxpose.xlu0.b32.cont [3/16] 0.0, 128
    %618 = vxpose.xlu0.b32.cont [4/16] 0.0, 128
    %619 = vxpose.xlu0.b32.cont [5/16] 0.0, 128
    %620 = vxpose.xlu0.b32.cont [6/16] 0.0, 128
    %621 = vxpose.xlu0.b32.cont [7/16] 0.0, 128
    %622 = vxpose.xlu0.b32.cont [8/16] 0.0, 128
    %623 = vxpose.xlu0.b32.cont [9/16] 0.0, 128
    %624 = vxpose.xlu0.b32.cont [10/16] 0.0, 128
    %625 = vxpose.xlu0.b32.cont [11/16] 0.0, 128
    %626 = vxpose.xlu0.b32.cont [12/16] 0.0, 128
    %627 = vxpose.xlu0.b32.cont [13/16] 0.0, 128
    %628 = vxpose.xlu0.b32.cont [14/16] 0.0, 128
    %629 = vxpose.xlu0.b32.cont [15/16] 0.0, 128
    %630 = vxpose.xlu0.b32.end [16/16] 0.0, 128
    %v631 = vpop.trf.xlu0
    %v632 = vpop.trf.xlu0
    %v633 = vpop.trf.xlu0
    %v634 = vpop.trf.xlu0
    %v635 = vpop.trf.xlu0
    %v636 = vpop.trf.xlu0
    %v637 = vpop.trf.xlu0
    %v638 = vpop.trf.xlu0
    %v639 = vpop.trf.xlu0
    %v640 = vpop.trf.xlu0
    %v641 = vpop.trf.xlu0
    %v642 = vpop.trf.xlu0
    %v643 = vpop.trf.xlu0
    %v644 = vpop.trf.xlu0
    %v645 = vpop.trf.xlu0
    %v646 = vpop.trf.xlu0
    %vm647 = vcmask 64512
    %v649 = vsel %vm647, %v343, 0
    %651 = vmatprep.subr.mxu0 0.0
    %652 = vmatpush1.msra.mxu0 %v283
    %653 = vmatprep.subr.mxu0 0.0
    %654 = vmatpush1.msra.mxu0 0.0
    %655 = vmatprep.subr.mxu0 0.0
    %656 = vmatpush1.msra.mxu0 0.0
    %657 = vmatprep.subr.mxu0 0.0
    %658 = vmatpush1.msra.mxu0 0.0
    %659 = vmatprep.subr.mxu0 0.0
    %660 = vmatpush1.msra.mxu0 0.0
    %661 = vmatprep.subr.mxu0 0.0
    %662 = vmatpush1.msra.mxu0 0.0
    %663 = vmatprep.subr.mxu0 0.0
    %664 = vmatpush1.msra.mxu0 0.0
    %665 = vmatprep.subr.mxu0 0.0
    %666 = vmatpush1.msra.mxu0 0.0
    %667 = vmatprep.subr.mxu0 0.0
    %668 = vmatpush1.msra.mxu0 0.0
    %669 = vmatprep.subr.mxu0 0.0
    %670 = vmatpush1.msra.mxu0 0.0
    %671 = vmatprep.subr.mxu0 0.0
    %672 = vmatpush1.msra.mxu0 0.0
    %673 = vmatprep.subr.mxu0 0.0
    %674 = vmatpush1.msra.mxu0 0.0
    %675 = vmatprep.subr.mxu0 0.0
    %676 = vmatpush1.msra.mxu0 0.0
    %677 = vmatprep.subr.mxu0 0.0
    %678 = vmatpush1.msra.mxu0 0.0
    %679 = vmatprep.subr.mxu0 0.0
    %680 = vmatpush1.msra.mxu0 0.0
    %681 = vmatprep.subr.mxu0 0.0
    %682 = vmatpush1.msra.mxu0 0.0
    %683 = vmatprep.subr.mxu0 0.0
    %684 = vmatpush1.msra.mxu0 0.0
    %685 = vmatprep.subr.mxu0 0.0
    %686 = vmatpush1.msra.mxu0 0.0
    %687 = vmatprep.subr.mxu0 0.0
    %688 = vmatpush1.msra.mxu0 0.0
    %689 = vmatprep.subr.mxu0 0.0
    %690 = vmatpush1.msra.mxu0 0.0
    %691 = vmatprep.subr.mxu0 0.0
    %692 = vmatpush1.msra.mxu0 0.0
    %693 = vmatprep.subr.mxu0 0.0
    %694 = vmatpush1.msra.mxu0 0.0
    %695 = vmatprep.subr.mxu0 0.0
    %696 = vmatpush1.msra.mxu0 0.0
    %697 = vmatprep.subr.mxu0 0.0
    %698 = vmatpush1.msra.mxu0 0.0
    %699 = vmatprep.subr.mxu0 0.0
    %700 = vmatpush1.msra.mxu0 0.0
    %701 = vmatprep.subr.mxu0 0.0
    %702 = vmatpush1.msra.mxu0 0.0
    %703 = vmatprep.subr.mxu0 0.0
    %704 = vmatpush1.msra.mxu0 0.0
    %705 = vmatprep.subr.mxu0 0.0
    %706 = vmatpush1.msra.mxu0 0.0
    %707 = vmatprep.subr.mxu0 0.0
    %708 = vmatpush1.msra.mxu0 0.0
    %709 = vmatprep.subr.mxu0 0.0
    %710 = vmatpush1.msra.mxu0 0.0
    %711 = vmatprep.subr.mxu0 0.0
    %712 = vmatpush1.msra.mxu0 0.0
    %713 = vmatprep.subr.mxu0 0.0
    %714 = vmatpush1.msra.mxu0 0.0
    %715 = vmatprep.mubr.f32.mxu0 0.0
    %716 = vmatmul.mubr.f32.gmra.mrb[0].mxu0 %v649
    %v717 = vpop.f32.mrb[0].mxu0
    %v718 = vadd.f32 0.0, %v717
    %v719 = vpop.f32.mrb[0].mxu0
    %720 = vdwg.mxu0
    %v722 = vsel %vm647, %v375, 0
    %724 = vmatprep.subr.mxu0 0.0
    %725 = vmatpush1.msra.mxu0 %v284
    %726 = vmatprep.subr.mxu0 0.0
    %727 = vmatpush1.msra.mxu0 0.0
    %728 = vmatprep.subr.mxu0 0.0
    %729 = vmatpush1.msra.mxu0 0.0
    %730 = vmatprep.subr.mxu0 0.0
    %731 = vmatpush1.msra.mxu0 0.0
    %732 = vmatprep.subr.mxu0 0.0
    %733 = vmatpush1.msra.mxu0 0.0
    %734 = vmatprep.subr.mxu0 0.0
    %735 = vmatpush1.msra.mxu0 0.0
    %736 = vmatprep.subr.mxu0 0.0
    %737 = vmatpush1.msra.mxu0 0.0
    %738 = vmatprep.subr.mxu0 0.0
    %739 = vmatpush1.msra.mxu0 0.0
    %740 = vmatprep.subr.mxu0 0.0
    %741 = vmatpush1.msra.mxu0 0.0
    %742 = vmatprep.subr.mxu0 0.0
    %743 = vmatpush1.msra.mxu0 0.0
    %744 = vmatprep.subr.mxu0 0.0
    %745 = vmatpush1.msra.mxu0 0.0
    %746 = vmatprep.subr.mxu0 0.0
    %747 = vmatpush1.msra.mxu0 0.0
    %748 = vmatprep.subr.mxu0 0.0
    %749 = vmatpush1.msra.mxu0 0.0
    %750 = vmatprep.subr.mxu0 0.0
    %751 = vmatpush1.msra.mxu0 0.0
    %752 = vmatprep.subr.mxu0 0.0
    %753 = vmatpush1.msra.mxu0 0.0
    %754 = vmatprep.subr.mxu0 0.0
    %755 = vmatpush1.msra.mxu0 0.0
    %756 = vmatprep.subr.mxu0 0.0
    %757 = vmatpush1.msra.mxu0 0.0
    %758 = vmatprep.subr.mxu0 0.0
    %759 = vmatpush1.msra.mxu0 0.0
    %760 = vmatprep.subr.mxu0 0.0
    %761 = vmatpush1.msra.mxu0 0.0
    %762 = vmatprep.subr.mxu0 0.0
    %763 = vmatpush1.msra.mxu0 0.0
    %764 = vmatprep.subr.mxu0 0.0
    %765 = vmatpush1.msra.mxu0 0.0
    %766 = vmatprep.subr.mxu0 0.0
    %767 = vmatpush1.msra.mxu0 0.0
    %768 = vmatprep.subr.mxu0 0.0
    %769 = vmatpush1.msra.mxu0 0.0
    %770 = vmatprep.subr.mxu0 0.0
    %771 = vmatpush1.msra.mxu0 0.0
    %772 = vmatprep.subr.mxu0 0.0
    %773 = vmatpush1.msra.mxu0 0.0
    %774 = vmatprep.subr.mxu0 0.0
    %775 = vmatpush1.msra.mxu0 0.0
    %776 = vmatprep.subr.mxu0 0.0
    %777 = vmatpush1.msra.mxu0 0.0
    %778 = vmatprep.subr.mxu0 0.0
    %779 = vmatpush1.msra.mxu0 0.0
    %780 = vmatprep.subr.mxu0 0.0
    %781 = vmatpush1.msra.mxu0 0.0
    %782 = vmatprep.subr.mxu0 0.0
    %783 = vmatpush1.msra.mxu0 0.0
    %784 = vmatprep.subr.mxu0 0.0
    %785 = vmatpush1.msra.mxu0 0.0
    %786 = vmatprep.subr.mxu0 0.0
    %787 = vmatpush1.msra.mxu0 0.0
    %788 = vmatprep.mubr.f32.mxu0 0.0
    %789 = vmatmul.mubr.f32.gmra.mrb[0].mxu0 %v722
    %v790 = vpop.f32.mrb[0].mxu0
    %v791 = vadd.f32 0.0, %v790
    %v792 = vpop.f32.mrb[0].mxu0
    %793 = vdwg.mxu0
    %v795 = vsel %vm647, %v407, 0
    %797 = vmatprep.subr.mxu0 0.0
    %798 = vmatpush1.msra.mxu0 %v285
    %799 = vmatprep.subr.mxu0 0.0
    %800 = vmatpush1.msra.mxu0 0.0
    %801 = vmatprep.subr.mxu0 0.0
    %802 = vmatpush1.msra.mxu0 0.0
    %803 = vmatprep.subr.mxu0 0.0
    %804 = vmatpush1.msra.mxu0 0.0
    %805 = vmatprep.subr.mxu0 0.0
    %806 = vmatpush1.msra.mxu0 0.0
    %807 = vmatprep.subr.mxu0 0.0
    %808 = vmatpush1.msra.mxu0 0.0
    %809 = vmatprep.subr.mxu0 0.0
    %810 = vmatpush1.msra.mxu0 0.0
    %811 = vmatprep.subr.mxu0 0.0
    %812 = vmatpush1.msra.mxu0 0.0
    %813 = vmatprep.subr.mxu0 0.0
    %814 = vmatpush1.msra.mxu0 0.0
    %815 = vmatprep.subr.mxu0 0.0
    %816 = vmatpush1.msra.mxu0 0.0
    %817 = vmatprep.subr.mxu0 0.0
    %818 = vmatpush1.msra.mxu0 0.0
    %819 = vmatprep.subr.mxu0 0.0
    %820 = vmatpush1.msra.mxu0 0.0
    %821 = vmatprep.subr.mxu0 0.0
    %822 = vmatpush1.msra.mxu0 0.0
    %823 = vmatprep.subr.mxu0 0.0
    %824 = vmatpush1.msra.mxu0 0.0
    %825 = vmatprep.subr.mxu0 0.0
    %826 = vmatpush1.msra.mxu0 0.0
    %827 = vmatprep.subr.mxu0 0.0
    %828 = vmatpush1.msra.mxu0 0.0
    %829 = vmatprep.subr.mxu0 0.0
    %830 = vmatpush1.msra.mxu0 0.0
    %831 = vmatprep.subr.mxu0 0.0
    %832 = vmatpush1.msra.mxu0 0.0
    %833 = vmatprep.subr.mxu0 0.0
    %834 = vmatpush1.msra.mxu0 0.0
    %835 = vmatprep.subr.mxu0 0.0
    %836 = vmatpush1.msra.mxu0 0.0
    %837 = vmatprep.subr.mxu0 0.0
    %838 = vmatpush1.msra.mxu0 0.0
    %839 = vmatprep.subr.mxu0 0.0
    %840 = vmatpush1.msra.mxu0 0.0
    %841 = vmatprep.subr.mxu0 0.0
    %842 = vmatpush1.msra.mxu0 0.0
    %843 = vmatprep.subr.mxu0 0.0
    %844 = vmatpush1.msra.mxu0 0.0
    %845 = vmatprep.subr.mxu0 0.0
    %846 = vmatpush1.msra.mxu0 0.0
    %847 = vmatprep.subr.mxu0 0.0
    %848 = vmatpush1.msra.mxu0 0.0
    %849 = vmatprep.subr.mxu0 0.0
    %850 = vmatpush1.msra.mxu0 0.0
    %851 = vmatprep.subr.mxu0 0.0
    %852 = vmatpush1.msra.mxu0 0.0
    %853 = vmatprep.subr.mxu0 0.0
    %854 = vmatpush1.msra.mxu0 0.0
    %855 = vmatprep.subr.mxu0 0.0
    %856 = vmatpush1.msra.mxu0 0.0
    %857 = vmatprep.subr.mxu0 0.0
    %858 = vmatpush1.msra.mxu0 0.0
    %859 = vmatprep.subr.mxu0 0.0
    %860 = vmatpush1.msra.mxu0 0.0
    %861 = vmatprep.mubr.f32.mxu0 0.0
    %862 = vmatmul.mubr.f32.gmra.mrb[0].mxu0 %v795
    %v863 = vpop.f32.mrb[0].mxu0
    %v864 = vadd.f32 0.0, %v863
    %v865 = vpop.f32.mrb[0].mxu0
    %866 = vdwg.mxu0
    %v868 = vsel %vm647, %v439, 0
    %870 = vmatprep.subr.mxu0 0.0
    %871 = vmatpush1.msra.mxu0 %v286
    %872 = vmatprep.subr.mxu0 0.0
    %873 = vmatpush1.msra.mxu0 0.0
    %874 = vmatprep.subr.mxu0 0.0
    %875 = vmatpush1.msra.mxu0 0.0
    %876 = vmatprep.subr.mxu0 0.0
    %877 = vmatpush1.msra.mxu0 0.0
    %878 = vmatprep.subr.mxu0 0.0
    %879 = vmatpush1.msra.mxu0 0.0
    %880 = vmatprep.subr.mxu0 0.0
    %881 = vmatpush1.msra.mxu0 0.0
    %882 = vmatprep.subr.mxu0 0.0
    %883 = vmatpush1.msra.mxu0 0.0
    %884 = vmatprep.subr.mxu0 0.0
    %885 = vmatpush1.msra.mxu0 0.0
    %886 = vmatprep.subr.mxu0 0.0
    %887 = vmatpush1.msra.mxu0 0.0
    %888 = vmatprep.subr.mxu0 0.0
    %889 = vmatpush1.msra.mxu0 0.0
    %890 = vmatprep.subr.mxu0 0.0
    %891 = vmatpush1.msra.mxu0 0.0
    %892 = vmatprep.subr.mxu0 0.0
    %893 = vmatpush1.msra.mxu0 0.0
    %894 = vmatprep.subr.mxu0 0.0
    %895 = vmatpush1.msra.mxu0 0.0
    %896 = vmatprep.subr.mxu0 0.0
    %897 = vmatpush1.msra.mxu0 0.0
    %898 = vmatprep.subr.mxu0 0.0
    %899 = vmatpush1.msra.mxu0 0.0
    %900 = vmatprep.subr.mxu0 0.0
    %901 = vmatpush1.msra.mxu0 0.0
    %902 = vmatprep.subr.mxu0 0.0
    %903 = vmatpush1.msra.mxu0 0.0
    %904 = vmatprep.subr.mxu0 0.0
    %905 = vmatpush1.msra.mxu0 0.0
    %906 = vmatprep.subr.mxu0 0.0
    %907 = vmatpush1.msra.mxu0 0.0
    %908 = vmatprep.subr.mxu0 0.0
    %909 = vmatpush1.msra.mxu0 0.0
    %910 = vmatprep.subr.mxu0 0.0
    %911 = vmatpush1.msra.mxu0 0.0
    %912 = vmatprep.subr.mxu0 0.0
    %913 = vmatpush1.msra.mxu0 0.0
    %914 = vmatprep.subr.mxu0 0.0
    %915 = vmatpush1.msra.mxu0 0.0
    %916 = vmatprep.subr.mxu0 0.0
    %917 = vmatpush1.msra.mxu0 0.0
    %918 = vmatprep.subr.mxu0 0.0
    %919 = vmatpush1.msra.mxu0 0.0
    %920 = vmatprep.subr.mxu0 0.0
    %921 = vmatpush1.msra.mxu0 0.0
    %922 = vmatprep.subr.mxu0 0.0
    %923 = vmatpush1.msra.mxu0 0.0
    %924 = vmatprep.subr.mxu0 0.0
    %925 = vmatpush1.msra.mxu0 0.0
    %926 = vmatprep.subr.mxu0 0.0
    %927 = vmatpush1.msra.mxu0 0.0
    %928 = vmatprep.subr.mxu0 0.0
    %929 = vmatpush1.msra.mxu0 0.0
    %930 = vmatprep.subr.mxu0 0.0
    %931 = vmatpush1.msra.mxu0 0.0
    %932 = vmatprep.subr.mxu0 0.0
    %933 = vmatpush1.msra.mxu0 0.0
    %934 = vmatprep.mubr.f32.mxu0 0.0
    %935 = vmatmul.mubr.f32.gmra.mrb[0].mxu0 %v868
    %v936 = vpop.f32.mrb[0].mxu0
    %v937 = vadd.f32 0.0, %v936
    %v938 = vpop.f32.mrb[0].mxu0
    %939 = vdwg.mxu0
    %v941 = vsel %vm647, %v471, 0
    %943 = vmatprep.subr.mxu0 0.0
    %944 = vmatpush1.msra.mxu0 %v315
    %945 = vmatprep.subr.mxu0 0.0
    %946 = vmatpush1.msra.mxu0 0.0
    %947 = vmatprep.subr.mxu0 0.0
    %948 = vmatpush1.msra.mxu0 0.0
    %949 = vmatprep.subr.mxu0 0.0
    %950 = vmatpush1.msra.mxu0 0.0
    %951 = vmatprep.subr.mxu0 0.0
    %952 = vmatpush1.msra.mxu0 0.0
    %953 = vmatprep.subr.mxu0 0.0
    %954 = vmatpush1.msra.mxu0 0.0
    %955 = vmatprep.subr.mxu0 0.0
    %956 = vmatpush1.msra.mxu0 0.0
    %957 = vmatprep.subr.mxu0 0.0
    %958 = vmatpush1.msra.mxu0 0.0
    %959 = vmatprep.subr.mxu0 0.0
    %960 = vmatpush1.msra.mxu0 0.0
    %961 = vmatprep.subr.mxu0 0.0
    %962 = vmatpush1.msra.mxu0 0.0
    %963 = vmatprep.subr.mxu0 0.0
    %964 = vmatpush1.msra.mxu0 0.0
    %965 = vmatprep.subr.mxu0 0.0
    %966 = vmatpush1.msra.mxu0 0.0
    %967 = vmatprep.subr.mxu0 0.0
    %968 = vmatpush1.msra.mxu0 0.0
    %969 = vmatprep.subr.mxu0 0.0
    %970 = vmatpush1.msra.mxu0 0.0
    %971 = vmatprep.subr.mxu0 0.0
    %972 = vmatpush1.msra.mxu0 0.0
    %973 = vmatprep.subr.mxu0 0.0
    %974 = vmatpush1.msra.mxu0 0.0
    %975 = vmatprep.subr.mxu0 0.0
    %976 = vmatpush1.msra.mxu0 0.0
    %977 = vmatprep.subr.mxu0 0.0
    %978 = vmatpush1.msra.mxu0 0.0
    %979 = vmatprep.subr.mxu0 0.0
    %980 = vmatpush1.msra.mxu0 0.0
    %981 = vmatprep.subr.mxu0 0.0
    %982 = vmatpush1.msra.mxu0 0.0
    %983 = vmatprep.subr.mxu0 0.0
    %984 = vmatpush1.msra.mxu0 0.0
    %985 = vmatprep.subr.mxu0 0.0
    %986 = vmatpush1.msra.mxu0 0.0
    %987 = vmatprep.subr.mxu0 0.0
    %988 = vmatpush1.msra.mxu0 0.0
    %989 = vmatprep.subr.mxu0 0.0
    %990 = vmatpush1.msra.mxu0 0.0
    %991 = vmatprep.subr.mxu0 0.0
    %992 = vmatpush1.msra.mxu0 0.0
    %993 = vmatprep.subr.mxu0 0.0
    %994 = vmatpush1.msra.mxu0 0.0
    %995 = vmatprep.subr.mxu0 0.0
    %996 = vmatpush1.msra.mxu0 0.0
    %997 = vmatprep.subr.mxu0 0.0
    %998 = vmatpush1.msra.mxu0 0.0
    %999 = vmatprep.subr.mxu0 0.0
    %1000 = vmatpush1.msra.mxu0 0.0
    %1001 = vmatprep.subr.mxu0 0.0
    %1002 = vmatpush1.msra.mxu0 0.0
    %1003 = vmatprep.subr.mxu0 0.0
    %1004 = vmatpush1.msra.mxu0 0.0
    %1005 = vmatprep.subr.mxu0 0.0
    %1006 = vmatpush1.msra.mxu0 0.0
    %1007 = vmatprep.mubr.f32.mxu0 0.0
    %1008 = vmatmul.mubr.f32.gmra.mrb[0].mxu0 %v941
    %v1009 = vpop.f32.mrb[0].mxu0
    %v1010 = vadd.f32 0.0, %v1009
    %v1011 = vpop.f32.mrb[0].mxu0
    %1012 = vdwg.mxu0
    %v1014 = vsel %vm647, %v503, 0
    %1016 = vmatprep.subr.mxu0 0.0
    %1017 = vmatpush1.msra.mxu0 %v316
    %1018 = vmatprep.subr.mxu0 0.0
    %1019 = vmatpush1.msra.mxu0 0.0
    %1020 = vmatprep.subr.mxu0 0.0
    %1021 = vmatpush1.msra.mxu0 0.0
    %1022 = vmatprep.subr.mxu0 0.0
    %1023 = vmatpush1.msra.mxu0 0.0
    %1024 = vmatprep.subr.mxu0 0.0
    %1025 = vmatpush1.msra.mxu0 0.0
    %1026 = vmatprep.subr.mxu0 0.0
    %1027 = vmatpush1.msra.mxu0 0.0
    %1028 = vmatprep.subr.mxu0 0.0
    %1029 = vmatpush1.msra.mxu0 0.0
    %1030 = vmatprep.subr.mxu0 0.0
    %1031 = vmatpush1.msra.mxu0 0.0
    %1032 = vmatprep.subr.mxu0 0.0
    %1033 = vmatpush1.msra.mxu0 0.0
    %1034 = vmatprep.subr.mxu0 0.0
    %1035 = vmatpush1.msra.mxu0 0.0
    %1036 = vmatprep.subr.mxu0 0.0
    %1037 = vmatpush1.msra.mxu0 0.0
    %1038 = vmatprep.subr.mxu0 0.0
    %1039 = vmatpush1.msra.mxu0 0.0
    %1040 = vmatprep.subr.mxu0 0.0
    %1041 = vmatpush1.msra.mxu0 0.0
    %1042 = vmatprep.subr.mxu0 0.0
    %1043 = vmatpush1.msra.mxu0 0.0
    %1044 = vmatprep.subr.mxu0 0.0
    %1045 = vmatpush1.msra.mxu0 0.0
    %1046 = vmatprep.subr.mxu0 0.0
    %1047 = vmatpush1.msra.mxu0 0.0
    %1048 = vmatprep.subr.mxu0 0.0
    %1049 = vmatpush1.msra.mxu0 0.0
    %1050 = vmatprep.subr.mxu0 0.0
    %1051 = vmatpush1.msra.mxu0 0.0
    %1052 = vmatprep.subr.mxu0 0.0
    %1053 = vmatpush1.msra.mxu0 0.0
    %1054 = vmatprep.subr.mxu0 0.0
    %1055 = vmatpush1.msra.mxu0 0.0
    %1056 = vmatprep.subr.mxu0 0.0
    %1057 = vmatpush1.msra.mxu0 0.0
    %1058 = vmatprep.subr.mxu0 0.0
    %1059 = vmatpush1.msra.mxu0 0.0
    %1060 = vmatprep.subr.mxu0 0.0
    %1061 = vmatpush1.msra.mxu0 0.0
    %1062 = vmatprep.subr.mxu0 0.0
    %1063 = vmatpush1.msra.mxu0 0.0
    %1064 = vmatprep.subr.mxu0 0.0
    %1065 = vmatpush1.msra.mxu0 0.0
    %1066 = vmatprep.subr.mxu0 0.0
    %1067 = vmatpush1.msra.mxu0 0.0
    %1068 = vmatprep.subr.mxu0 0.0
    %1069 = vmatpush1.msra.mxu0 0.0
    %1070 = vmatprep.subr.mxu0 0.0
    %1071 = vmatpush1.msra.mxu0 0.0
    %1072 = vmatprep.subr.mxu0 0.0
    %1073 = vmatpush1.msra.mxu0 0.0
    %1074 = vmatprep.subr.mxu0 0.0
    %1075 = vmatpush1.msra.mxu0 0.0
    %1076 = vmatprep.subr.mxu0 0.0
    %1077 = vmatpush1.msra.mxu0 0.0
    %1078 = vmatprep.subr.mxu0 0.0
    %1079 = vmatpush1.msra.mxu0 0.0
    %1080 = vmatprep.mubr.f32.mxu0 0.0
    %1081 = vmatmul.mubr.f32.gmra.mrb[0].mxu0 %v1014
    %v1082 = vpop.f32.mrb[0].mxu0
    %v1083 = vadd.f32 0.0, %v1082
    %v1084 = vpop.f32.mrb[0].mxu0
    %1085 = vdwg.mxu0
    %v1087 = vsel %vm647, %v535, 0
    %1089 = vmatprep.subr.mxu0 0.0
    %1090 = vmatpush1.msra.mxu0 %v317
    %1091 = vmatprep.subr.mxu0 0.0
    %1092 = vmatpush1.msra.mxu0 0.0
    %1093 = vmatprep.subr.mxu0 0.0
    %1094 = vmatpush1.msra.mxu0 0.0
    %1095 = vmatprep.subr.mxu0 0.0
    %1096 = vmatpush1.msra.mxu0 0.0
    %1097 = vmatprep.subr.mxu0 0.0
    %1098 = vmatpush1.msra.mxu0 0.0
    %1099 = vmatprep.subr.mxu0 0.0
    %1100 = vmatpush1.msra.mxu0 0.0
    %1101 = vmatprep.subr.mxu0 0.0
    %1102 = vmatpush1.msra.mxu0 0.0
    %1103 = vmatprep.subr.mxu0 0.0
    %1104 = vmatpush1.msra.mxu0 0.0
    %1105 = vmatprep.subr.mxu0 0.0
    %1106 = vmatpush1.msra.mxu0 0.0
    %1107 = vmatprep.subr.mxu0 0.0
    %1108 = vmatpush1.msra.mxu0 0.0
    %1109 = vmatprep.subr.mxu0 0.0
    %1110 = vmatpush1.msra.mxu0 0.0
    %1111 = vmatprep.subr.mxu0 0.0
    %1112 = vmatpush1.msra.mxu0 0.0
    %1113 = vmatprep.subr.mxu0 0.0
    %1114 = vmatpush1.msra.mxu0 0.0
    %1115 = vmatprep.subr.mxu0 0.0
    %1116 = vmatpush1.msra.mxu0 0.0
    %1117 = vmatprep.subr.mxu0 0.0
    %1118 = vmatpush1.msra.mxu0 0.0
    %1119 = vmatprep.subr.mxu0 0.0
    %1120 = vmatpush1.msra.mxu0 0.0
    %1121 = vmatprep.subr.mxu0 0.0
    %1122 = vmatpush1.msra.mxu0 0.0
    %1123 = vmatprep.subr.mxu0 0.0
    %1124 = vmatpush1.msra.mxu0 0.0
    %1125 = vmatprep.subr.mxu0 0.0
    %1126 = vmatpush1.msra.mxu0 0.0
    %1127 = vmatprep.subr.mxu0 0.0
    %1128 = vmatpush1.msra.mxu0 0.0
    %1129 = vmatprep.subr.mxu0 0.0
    %1130 = vmatpush1.msra.mxu0 0.0
    %1131 = vmatprep.subr.mxu0 0.0
    %1132 = vmatpush1.msra.mxu0 0.0
    %1133 = vmatprep.subr.mxu0 0.0
    %1134 = vmatpush1.msra.mxu0 0.0
    %1135 = vmatprep.subr.mxu0 0.0
    %1136 = vmatpush1.msra.mxu0 0.0
    %1137 = vmatprep.subr.mxu0 0.0
    %1138 = vmatpush1.msra.mxu0 0.0
    %1139 = vmatprep.subr.mxu0 0.0
    %1140 = vmatpush1.msra.mxu0 0.0
    %1141 = vmatprep.subr.mxu0 0.0
    %1142 = vmatpush1.msra.mxu0 0.0
    %1143 = vmatprep.subr.mxu0 0.0
    %1144 = vmatpush1.msra.mxu0 0.0
    %1145 = vmatprep.subr.mxu0 0.0
    %1146 = vmatpush1.msra.mxu0 0.0
    %1147 = vmatprep.subr.mxu0 0.0
    %1148 = vmatpush1.msra.mxu0 0.0
    %1149 = vmatprep.subr.mxu0 0.0
    %1150 = vmatpush1.msra.mxu0 0.0
    %1151 = vmatprep.subr.mxu0 0.0
    %1152 = vmatpush1.msra.mxu0 0.0
    %1153 = vmatprep.mubr.f32.mxu0 0.0
    %1154 = vmatmul.mubr.f32.gmra.mrb[0].mxu0 %v1087
    %v1155 = vpop.f32.mrb[0].mxu0
    %v1156 = vadd.f32 0.0, %v1155
    %v1157 = vpop.f32.mrb[0].mxu0
    %1158 = vdwg.mxu0
    %v1160 = vsel %vm647, %v567, 0
    %1162 = vmatprep.subr.mxu0 0.0
    %1163 = vmatpush1.msra.mxu0 %v318
    %1164 = vmatprep.subr.mxu0 0.0
    %1165 = vmatpush1.msra.mxu0 0.0
    %1166 = vmatprep.subr.mxu0 0.0
    %1167 = vmatpush1.msra.mxu0 0.0
    %1168 = vmatprep.subr.mxu0 0.0
    %1169 = vmatpush1.msra.mxu0 0.0
    %1170 = vmatprep.subr.mxu0 0.0
    %1171 = vmatpush1.msra.mxu0 0.0
    %1172 = vmatprep.subr.mxu0 0.0
    %1173 = vmatpush1.msra.mxu0 0.0
    %1174 = vmatprep.subr.mxu0 0.0
    %1175 = vmatpush1.msra.mxu0 0.0
    %1176 = vmatprep.subr.mxu0 0.0
    %1177 = vmatpush1.msra.mxu0 0.0
    %1178 = vmatprep.subr.mxu0 0.0
    %1179 = vmatpush1.msra.mxu0 0.0
    %1180 = vmatprep.subr.mxu0 0.0
    %1181 = vmatpush1.msra.mxu0 0.0
    %1182 = vmatprep.subr.mxu0 0.0
    %1183 = vmatpush1.msra.mxu0 0.0
    %1184 = vmatprep.subr.mxu0 0.0
    %1185 = vmatpush1.msra.mxu0 0.0
    %1186 = vmatprep.subr.mxu0 0.0
    %1187 = vmatpush1.msra.mxu0 0.0
    %1188 = vmatprep.subr.mxu0 0.0
    %1189 = vmatpush1.msra.mxu0 0.0
    %1190 = vmatprep.subr.mxu0 0.0
    %1191 = vmatpush1.msra.mxu0 0.0
    %1192 = vmatprep.subr.mxu0 0.0
    %1193 = vmatpush1.msra.mxu0 0.0
    %1194 = vmatprep.subr.mxu0 0.0
    %1195 = vmatpush1.msra.mxu0 0.0
    %1196 = vmatprep.subr.mxu0 0.0
    %1197 = vmatpush1.msra.mxu0 0.0
    %1198 = vmatprep.subr.mxu0 0.0
    %1199 = vmatpush1.msra.mxu0 0.0
    %1200 = vmatprep.subr.mxu0 0.0
    %1201 = vmatpush1.msra.mxu0 0.0
    %1202 = vmatprep.subr.mxu0 0.0
    %1203 = vmatpush1.msra.mxu0 0.0
    %1204 = vmatprep.subr.mxu0 0.0
    %1205 = vmatpush1.msra.mxu0 0.0
    %1206 = vmatprep.subr.mxu0 0.0
    %1207 = vmatpush1.msra.mxu0 0.0
    %1208 = vmatprep.subr.mxu0 0.0
    %1209 = vmatpush1.msra.mxu0 0.0
    %1210 = vmatprep.subr.mxu0 0.0
    %1211 = vmatpush1.msra.mxu0 0.0
    %1212 = vmatprep.subr.mxu0 0.0
    %1213 = vmatpush1.msra.mxu0 0.0
    %1214 = vmatprep.subr.mxu0 0.0
    %1215 = vmatpush1.msra.mxu0 0.0
    %1216 = vmatprep.subr.mxu0 0.0
    %1217 = vmatpush1.msra.mxu0 0.0
    %1218 = vmatprep.subr.mxu0 0.0
    %1219 = vmatpush1.msra.mxu0 0.0
    %1220 = vmatprep.subr.mxu0 0.0
    %1221 = vmatpush1.msra.mxu0 0.0
    %1222 = vmatprep.subr.mxu0 0.0
    %1223 = vmatpush1.msra.mxu0 0.0
    %1224 = vmatprep.subr.mxu0 0.0
    %1225 = vmatpush1.msra.mxu0 0.0
    %1226 = vmatprep.mubr.f32.mxu0 0.0
    %1227 = vmatmul.mubr.f32.gmra.mrb[0].mxu0 %v1160
    %v1228 = vpop.f32.mrb[0].mxu0
    %v1229 = vadd.f32 0.0, %v1228
    %v1230 = vpop.f32.mrb[0].mxu0
    %1231 = vdwg.mxu0
    %v1232 = vlaneseq
    %v1233 = vshrl.u32 %v1232, 7
    %v1234 = vlaneseq
    %v1235 = vand.u32 %v1234, 127
    %vm1236 = vcmp.le.s32.totalorder %v1235, %v1233
    %v1237 = vsel %vm1236, %v718, -100000.0
    %v1238 = vsel %vm1236, %v791, -100000.0
    %v1239 = vsel %vm1236, %v864, -100000.0
    %v1240 = vsel %vm1236, %v937, -100000.0
    %v1241 = vsel %vm1236, %v1010, -100000.0
    %v1242 = vsel %vm1236, %v1083, -100000.0
    %v1243 = vsel %vm1236, %v1156, -100000.0
    %v1244 = vsel %vm1236, %v1229, -100000.0
    %v1245 = vsel %vm647, %v1237, -inf
    %1246 = vmax.xlane.f32.xlu0 %v1245
    %v1247 = vpop.xlane.xlu0 %1246
    %v1248 = vsel %vm647, %v1238, -inf
    %1249 = vmax.xlane.f32.xlu0 %v1248
    %v1250 = vpop.xlane.xlu0 %1249
    %v1251 = vsel %vm647, %v1239, -inf
    %1252 = vmax.xlane.f32.xlu0 %v1251
    %v1253 = vpop.xlane.xlu0 %1252
    %v1254 = vsel %vm647, %v1240, -inf
    %1255 = vmax.xlane.f32.xlu0 %v1254
    %v1256 = vpop.xlane.xlu0 %1255
    %v1257 = vsel %vm647, %v1241, -inf
    %1258 = vmax.xlane.f32.xlu0 %v1257
    %v1259 = vpop.xlane.xlu0 %1258
    %v1260 = vsel %vm647, %v1242, -inf
    %1261 = vmax.xlane.f32.xlu0 %v1260
    %v1262 = vpop.xlane.xlu0 %1261
    %v1263 = vsel %vm647, %v1243, -inf
    %1264 = vmax.xlane.f32.xlu0 %v1263
    %v1265 = vpop.xlane.xlu0 %1264
    %v1266 = vsel %vm647, %v1244, -inf
    %1267 = vmax.xlane.f32.xlu0 %v1266
    %v1268 = vpop.xlane.xlu0 %1267
    %v1269 = vsub.f32 %v1237, %v1247
    %v1270 = vsub.f32 %v1238, %v1250
    %v1271 = vsub.f32 %v1239, %v1253
    %v1272 = vsub.f32 %v1240, %v1256
    %v1273 = vsub.f32 %v1241, %v1259
    %v1274 = vsub.f32 %v1242, %v1262
    %v1275 = vsub.f32 %v1243, %v1265
    %v1276 = vsub.f32 %v1244, %v1268
    %v1277 = vmul.f32 %v1269, 1.442695
    %v1278 = vpow.pop %v1277
    %v1279 = vmul.f32 %v1270, 1.442695
    %v1280 = vpow.pop %v1279
    %v1281 = vmul.f32 %v1271, 1.442695
    %v1282 = vpow.pop %v1281
    %v1283 = vmul.f32 %v1272, 1.442695
    %v1284 = vpow.pop %v1283
    %v1285 = vmul.f32 %v1273, 1.442695
    %v1286 = vpow.pop %v1285
    %v1287 = vmul.f32 %v1274, 1.442695
    %v1288 = vpow.pop %v1287
    %v1289 = vmul.f32 %v1275, 1.442695
    %v1290 = vpow.pop %v1289
    %v1291 = vmul.f32 %v1276, 1.442695
    %v1292 = vpow.pop %v1291
    %v1293 = vsel %vm647, %v1278, 0.0
    %1294 = vadd.xlane.f32.xlu0 %v1293
    %v1295 = vpop.xlane.xlu0 %1294
    %v1296 = vsel %vm647, %v1280, 0.0
    %1297 = vadd.xlane.f32.xlu0 %v1296
    %v1298 = vpop.xlane.xlu0 %1297
    %v1299 = vsel %vm647, %v1282, 0.0
    %1300 = vadd.xlane.f32.xlu0 %v1299
    %v1301 = vpop.xlane.xlu0 %1300
    %v1302 = vsel %vm647, %v1284, 0.0
    %1303 = vadd.xlane.f32.xlu0 %v1302
    %v1304 = vpop.xlane.xlu0 %1303
    %v1305 = vsel %vm647, %v1286, 0.0
    %1306 = vadd.xlane.f32.xlu0 %v1305
    %v1307 = vpop.xlane.xlu0 %1306
    %v1308 = vsel %vm647, %v1288, 0.0
    %1309 = vadd.xlane.f32.xlu0 %v1308
    %v1310 = vpop.xlane.xlu0 %1309
    %v1311 = vsel %vm647, %v1290, 0.0
    %1312 = vadd.xlane.f32.xlu0 %v1311
    %v1313 = vpop.xlane.xlu0 %1312
    %v1314 = vsel %vm647, %v1292, 0.0
    %1315 = vadd.xlane.f32.xlu0 %v1314
    %v1316 = vpop.xlane.xlu0 %1315
    %v1318 = vsel %vm647, %v1278, 0
    %v1321 = vsel %vm647, %v599, 0
    %1323 = vmatprep.subr.mxu0 0.0
    %1324 = vmatpush1.xpose.msra.mxu0 %v1321
    %1325 = vmatprep.subr.mxu0 0.0
    %1326 = vmatpush1.xpose.msra.mxu0 0.0
    %1327 = vmatprep.subr.mxu0 0.0
    %1328 = vmatpush1.xpose.msra.mxu0 0.0
    %1329 = vmatprep.subr.mxu0 0.0
    %1330 = vmatpush1.xpose.msra.mxu0 0.0
    %1331 = vmatprep.subr.mxu0 0.0
    %1332 = vmatpush1.xpose.msra.mxu0 0.0
    %1333 = vmatprep.subr.mxu0 0.0
    %1334 = vmatpush1.xpose.msra.mxu0 0.0
    %1335 = vmatprep.subr.mxu0 0.0
    %1336 = vmatpush1.xpose.msra.mxu0 0.0
    %1337 = vmatprep.subr.mxu0 0.0
    %1338 = vmatpush1.xpose.msra.mxu0 0.0
    %1339 = vmatprep.subr.mxu0 0.0
    %1340 = vmatpush1.xpose.msra.mxu0 0.0
    %1341 = vmatprep.subr.mxu0 0.0
    %1342 = vmatpush1.xpose.msra.mxu0 0.0
    %1343 = vmatprep.subr.mxu0 0.0
    %1344 = vmatpush1.xpose.msra.mxu0 0.0
    %1345 = vmatprep.subr.mxu0 0.0
    %1346 = vmatpush1.xpose.msra.mxu0 0.0
    %1347 = vmatprep.subr.mxu0 0.0
    %1348 = vmatpush1.xpose.msra.mxu0 0.0
    %1349 = vmatprep.subr.mxu0 0.0
    %1350 = vmatpush1.xpose.msra.mxu0 0.0
    %1351 = vmatprep.subr.mxu0 0.0
    %1352 = vmatpush1.xpose.msra.mxu0 0.0
    %1353 = vmatprep.subr.mxu0 0.0
    %1354 = vmatpush1.xpose.msra.mxu0 0.0
    %1355 = vmatprep.subr.mxu0 0.0
    %1356 = vmatpush1.xpose.msra.mxu0 0.0
    %1357 = vmatprep.subr.mxu0 0.0
    %1358 = vmatpush1.xpose.msra.mxu0 0.0
    %1359 = vmatprep.subr.mxu0 0.0
    %1360 = vmatpush1.xpose.msra.mxu0 0.0
    %1361 = vmatprep.subr.mxu0 0.0
    %1362 = vmatpush1.xpose.msra.mxu0 0.0
    %1363 = vmatprep.subr.mxu0 0.0
    %1364 = vmatpush1.xpose.msra.mxu0 0.0
    %1365 = vmatprep.subr.mxu0 0.0
    %1366 = vmatpush1.xpose.msra.mxu0 0.0
    %1367 = vmatprep.subr.mxu0 0.0
    %1368 = vmatpush1.xpose.msra.mxu0 0.0
    %1369 = vmatprep.subr.mxu0 0.0
    %1370 = vmatpush1.xpose.msra.mxu0 0.0
    %1371 = vmatprep.subr.mxu0 0.0
    %1372 = vmatpush1.xpose.msra.mxu0 0.0
    %1373 = vmatprep.subr.mxu0 0.0
    %1374 = vmatpush1.xpose.msra.mxu0 0.0
    %1375 = vmatprep.subr.mxu0 0.0
    %1376 = vmatpush1.xpose.msra.mxu0 0.0
    %1377 = vmatprep.subr.mxu0 0.0
    %1378 = vmatpush1.xpose.msra.mxu0 0.0
    %1379 = vmatprep.subr.mxu0 0.0
    %1380 = vmatpush1.xpose.msra.mxu0 0.0
    %1381 = vmatprep.subr.mxu0 0.0
    %1382 = vmatpush1.xpose.msra.mxu0 0.0
    %1383 = vmatprep.subr.mxu0 0.0
    %1384 = vmatpush1.xpose.msra.mxu0 0.0
    %1385 = vmatprep.subr.mxu0 0.0
    %1386 = vmatpush1.xpose.msra.mxu0 0.0
    %1387 = vmatprep.mubr.f32.mxu0 0.0
    %1388 = vmatmul.mubr.f32.gmra.mrb[0].mxu0 %v1318
    %v1389 = vpop.f32.mrb[0].mxu0
    %v1390 = vadd.f32 0.0, %v1389
    %v1391 = vpop.f32.mrb[0].mxu0
    %1392 = vdwg.mxu0
    %v1394 = vsel %vm647, %v1280, 0
    %v1397 = vsel %vm647, %v600, 0
    %1399 = vmatprep.subr.mxu0 0.0
    %1400 = vmatpush1.xpose.msra.mxu0 %v1397
    %1401 = vmatprep.subr.mxu0 0.0
    %1402 = vmatpush1.xpose.msra.mxu0 0.0
    %1403 = vmatprep.subr.mxu0 0.0
    %1404 = vmatpush1.xpose.msra.mxu0 0.0
    %1405 = vmatprep.subr.mxu0 0.0
    %1406 = vmatpush1.xpose.msra.mxu0 0.0
    %1407 = vmatprep.subr.mxu0 0.0
    %1408 = vmatpush1.xpose.msra.mxu0 0.0
    %1409 = vmatprep.subr.mxu0 0.0
    %1410 = vmatpush1.xpose.msra.mxu0 0.0
    %1411 = vmatprep.subr.mxu0 0.0
    %1412 = vmatpush1.xpose.msra.mxu0 0.0
    %1413 = vmatprep.subr.mxu0 0.0
    %1414 = vmatpush1.xpose.msra.mxu0 0.0
    %1415 = vmatprep.subr.mxu0 0.0
    %1416 = vmatpush1.xpose.msra.mxu0 0.0
    %1417 = vmatprep.subr.mxu0 0.0
    %1418 = vmatpush1.xpose.msra.mxu0 0.0
    %1419 = vmatprep.subr.mxu0 0.0
    %1420 = vmatpush1.xpose.msra.mxu0 0.0
    %1421 = vmatprep.subr.mxu0 0.0
    %1422 = vmatpush1.xpose.msra.mxu0 0.0
    %1423 = vmatprep.subr.mxu0 0.0
    %1424 = vmatpush1.xpose.msra.mxu0 0.0
    %1425 = vmatprep.subr.mxu0 0.0
    %1426 = vmatpush1.xpose.msra.mxu0 0.0
    %1427 = vmatprep.subr.mxu0 0.0
    %1428 = vmatpush1.xpose.msra.mxu0 0.0
    %1429 = vmatprep.subr.mxu0 0.0
    %1430 = vmatpush1.xpose.msra.mxu0 0.0
    %1431 = vmatprep.subr.mxu0 0.0
    %1432 = vmatpush1.xpose.msra.mxu0 0.0
    %1433 = vmatprep.subr.mxu0 0.0
    %1434 = vmatpush1.xpose.msra.mxu0 0.0
    %1435 = vmatprep.subr.mxu0 0.0
    %1436 = vmatpush1.xpose.msra.mxu0 0.0
    %1437 = vmatprep.subr.mxu0 0.0
    %1438 = vmatpush1.xpose.msra.mxu0 0.0
    %1439 = vmatprep.subr.mxu0 0.0
    %1440 = vmatpush1.xpose.msra.mxu0 0.0
    %1441 = vmatprep.subr.mxu0 0.0
    %1442 = vmatpush1.xpose.msra.mxu0 0.0
    %1443 = vmatprep.subr.mxu0 0.0
    %1444 = vmatpush1.xpose.msra.mxu0 0.0
    %1445 = vmatprep.subr.mxu0 0.0
    %1446 = vmatpush1.xpose.msra.mxu0 0.0
    %1447 = vmatprep.subr.mxu0 0.0
    %1448 = vmatpush1.xpose.msra.mxu0 0.0
    %1449 = vmatprep.subr.mxu0 0.0
    %1450 = vmatpush1.xpose.msra.mxu0 0.0
    %1451 = vmatprep.subr.mxu0 0.0
    %1452 = vmatpush1.xpose.msra.mxu0 0.0
    %1453 = vmatprep.subr.mxu0 0.0
    %1454 = vmatpush1.xpose.msra.mxu0 0.0
    %1455 = vmatprep.subr.mxu0 0.0
    %1456 = vmatpush1.xpose.msra.mxu0 0.0
    %1457 = vmatprep.subr.mxu0 0.0
    %1458 = vmatpush1.xpose.msra.mxu0 0.0
    %1459 = vmatprep.subr.mxu0 0.0
    %1460 = vmatpush1.xpose.msra.mxu0 0.0
    %1461 = vmatprep.subr.mxu0 0.0
    %1462 = vmatpush1.xpose.msra.mxu0 0.0
    %1463 = vmatprep.mubr.f32.mxu0 0.0
    %1464 = vmatmul.mubr.f32.gmra.mrb[0].mxu0 %v1394
    %v1465 = vpop.f32.mrb[0].mxu0
    %v1466 = vadd.f32 0.0, %v1465
    %v1467 = vpop.f32.mrb[0].mxu0
    %1468 = vdwg.mxu0
    %v1470 = vsel %vm647, %v1282, 0
    %v1473 = vsel %vm647, %v601, 0
    %1475 = vmatprep.subr.mxu0 0.0
    %1476 = vmatpush1.xpose.msra.mxu0 %v1473
    %1477 = vmatprep.subr.mxu0 0.0
    %1478 = vmatpush1.xpose.msra.mxu0 0.0
    %1479 = vmatprep.subr.mxu0 0.0
    %1480 = vmatpush1.xpose.msra.mxu0 0.0
    %1481 = vmatprep.subr.mxu0 0.0
    %1482 = vmatpush1.xpose.msra.mxu0 0.0
    %1483 = vmatprep.subr.mxu0 0.0
    %1484 = vmatpush1.xpose.msra.mxu0 0.0
    %1485 = vmatprep.subr.mxu0 0.0
    %1486 = vmatpush1.xpose.msra.mxu0 0.0
    %1487 = vmatprep.subr.mxu0 0.0
    %1488 = vmatpush1.xpose.msra.mxu0 0.0
    %1489 = vmatprep.subr.mxu0 0.0
    %1490 = vmatpush1.xpose.msra.mxu0 0.0
    %1491 = vmatprep.subr.mxu0 0.0
    %1492 = vmatpush1.xpose.msra.mxu0 0.0
    %1493 = vmatprep.subr.mxu0 0.0
    %1494 = vmatpush1.xpose.msra.mxu0 0.0
    %1495 = vmatprep.subr.mxu0 0.0
    %1496 = vmatpush1.xpose.msra.mxu0 0.0
    %1497 = vmatprep.subr.mxu0 0.0
    %1498 = vmatpush1.xpose.msra.mxu0 0.0
    %1499 = vmatprep.subr.mxu0 0.0
    %1500 = vmatpush1.xpose.msra.mxu0 0.0
    %1501 = vmatprep.subr.mxu0 0.0
    %1502 = vmatpush1.xpose.msra.mxu0 0.0
    %1503 = vmatprep.subr.mxu0 0.0
    %1504 = vmatpush1.xpose.msra.mxu0 0.0
    %1505 = vmatprep.subr.mxu0 0.0
    %1506 = vmatpush1.xpose.msra.mxu0 0.0
    %1507 = vmatprep.subr.mxu0 0.0
    %1508 = vmatpush1.xpose.msra.mxu0 0.0
    %1509 = vmatprep.subr.mxu0 0.0
    %1510 = vmatpush1.xpose.msra.mxu0 0.0
    %1511 = vmatprep.subr.mxu0 0.0
    %1512 = vmatpush1.xpose.msra.mxu0 0.0
    %1513 = vmatprep.subr.mxu0 0.0
    %1514 = vmatpush1.xpose.msra.mxu0 0.0
    %1515 = vmatprep.subr.mxu0 0.0
    %1516 = vmatpush1.xpose.msra.mxu0 0.0
    %1517 = vmatprep.subr.mxu0 0.0
    %1518 = vmatpush1.xpose.msra.mxu0 0.0
    %1519 = vmatprep.subr.mxu0 0.0
    %1520 = vmatpush1.xpose.msra.mxu0 0.0
    %1521 = vmatprep.subr.mxu0 0.0
    %1522 = vmatpush1.xpose.msra.mxu0 0.0
    %1523 = vmatprep.subr.mxu0 0.0
    %1524 = vmatpush1.xpose.msra.mxu0 0.0
    %1525 = vmatprep.subr.mxu0 0.0
    %1526 = vmatpush1.xpose.msra.mxu0 0.0
    %1527 = vmatprep.subr.mxu0 0.0
    %1528 = vmatpush1.xpose.msra.mxu0 0.0
    %1529 = vmatprep.subr.mxu0 0.0
    %1530 = vmatpush1.xpose.msra.mxu0 0.0
    %1531 = vmatprep.subr.mxu0 0.0
    %1532 = vmatpush1.xpose.msra.mxu0 0.0
    %1533 = vmatprep.subr.mxu0 0.0
    %1534 = vmatpush1.xpose.msra.mxu0 0.0
    %1535 = vmatprep.subr.mxu0 0.0
    %1536 = vmatpush1.xpose.msra.mxu0 0.0
    %1537 = vmatprep.subr.mxu0 0.0
    %1538 = vmatpush1.xpose.msra.mxu0 0.0
    %1539 = vmatprep.mubr.f32.mxu0 0.0
    %1540 = vmatmul.mubr.f32.gmra.mrb[0].mxu0 %v1470
    %v1541 = vpop.f32.mrb[0].mxu0
    %v1542 = vadd.f32 0.0, %v1541
    %v1543 = vpop.f32.mrb[0].mxu0
    %1544 = vdwg.mxu0
    %v1546 = vsel %vm647, %v1284, 0
    %v1549 = vsel %vm647, %v602, 0
    %1551 = vmatprep.subr.mxu0 0.0
    %1552 = vmatpush1.xpose.msra.mxu0 %v1549
    %1553 = vmatprep.subr.mxu0 0.0
    %1554 = vmatpush1.xpose.msra.mxu0 0.0
    %1555 = vmatprep.subr.mxu0 0.0
    %1556 = vmatpush1.xpose.msra.mxu0 0.0
    %1557 = vmatprep.subr.mxu0 0.0
    %1558 = vmatpush1.xpose.msra.mxu0 0.0
    %1559 = vmatprep.subr.mxu0 0.0
    %1560 = vmatpush1.xpose.msra.mxu0 0.0
    %1561 = vmatprep.subr.mxu0 0.0
    %1562 = vmatpush1.xpose.msra.mxu0 0.0
    %1563 = vmatprep.subr.mxu0 0.0
    %1564 = vmatpush1.xpose.msra.mxu0 0.0
    %1565 = vmatprep.subr.mxu0 0.0
    %1566 = vmatpush1.xpose.msra.mxu0 0.0
    %1567 = vmatprep.subr.mxu0 0.0
    %1568 = vmatpush1.xpose.msra.mxu0 0.0
    %1569 = vmatprep.subr.mxu0 0.0
    %1570 = vmatpush1.xpose.msra.mxu0 0.0
    %1571 = vmatprep.subr.mxu0 0.0
    %1572 = vmatpush1.xpose.msra.mxu0 0.0
    %1573 = vmatprep.subr.mxu0 0.0
    %1574 = vmatpush1.xpose.msra.mxu0 0.0
    %1575 = vmatprep.subr.mxu0 0.0
    %1576 = vmatpush1.xpose.msra.mxu0 0.0
    %1577 = vmatprep.subr.mxu0 0.0
    %1578 = vmatpush1.xpose.msra.mxu0 0.0
    %1579 = vmatprep.subr.mxu0 0.0
    %1580 = vmatpush1.xpose.msra.mxu0 0.0
    %1581 = vmatprep.subr.mxu0 0.0
    %1582 = vmatpush1.xpose.msra.mxu0 0.0
    %1583 = vmatprep.subr.mxu0 0.0
    %1584 = vmatpush1.xpose.msra.mxu0 0.0
    %1585 = vmatprep.subr.mxu0 0.0
    %1586 = vmatpush1.xpose.msra.mxu0 0.0
    %1587 = vmatprep.subr.mxu0 0.0
    %1588 = vmatpush1.xpose.msra.mxu0 0.0
    %1589 = vmatprep.subr.mxu0 0.0
    %1590 = vmatpush1.xpose.msra.mxu0 0.0
    %1591 = vmatprep.subr.mxu0 0.0
    %1592 = vmatpush1.xpose.msra.mxu0 0.0
    %1593 = vmatprep.subr.mxu0 0.0
    %1594 = vmatpush1.xpose.msra.mxu0 0.0
    %1595 = vmatprep.subr.mxu0 0.0
    %1596 = vmatpush1.xpose.msra.mxu0 0.0
    %1597 = vmatprep.subr.mxu0 0.0
    %1598 = vmatpush1.xpose.msra.mxu0 0.0
    %1599 = vmatprep.subr.mxu0 0.0
    %1600 = vmatpush1.xpose.msra.mxu0 0.0
    %1601 = vmatprep.subr.mxu0 0.0
    %1602 = vmatpush1.xpose.msra.mxu0 0.0
    %1603 = vmatprep.subr.mxu0 0.0
    %1604 = vmatpush1.xpose.msra.mxu0 0.0
    %1605 = vmatprep.subr.mxu0 0.0
    %1606 = vmatpush1.xpose.msra.mxu0 0.0
    %1607 = vmatprep.subr.mxu0 0.0
    %1608 = vmatpush1.xpose.msra.mxu0 0.0
    %1609 = vmatprep.subr.mxu0 0.0
    %1610 = vmatpush1.xpose.msra.mxu0 0.0
    %1611 = vmatprep.subr.mxu0 0.0
    %1612 = vmatpush1.xpose.msra.mxu0 0.0
    %1613 = vmatprep.subr.mxu0 0.0
    %1614 = vmatpush1.xpose.msra.mxu0 0.0
    %1615 = vmatprep.mubr.f32.mxu0 0.0
    %1616 = vmatmul.mubr.f32.gmra.mrb[0].mxu0 %v1546
    %v1617 = vpop.f32.mrb[0].mxu0
    %v1618 = vadd.f32 0.0, %v1617
    %v1619 = vpop.f32.mrb[0].mxu0
    %1620 = vdwg.mxu0
    %v1622 = vsel %vm647, %v1286, 0
    %v1625 = vsel %vm647, %v631, 0
    %1627 = vmatprep.subr.mxu0 0.0
    %1628 = vmatpush1.xpose.msra.mxu0 %v1625
    %1629 = vmatprep.subr.mxu0 0.0
    %1630 = vmatpush1.xpose.msra.mxu0 0.0
    %1631 = vmatprep.subr.mxu0 0.0
    %1632 = vmatpush1.xpose.msra.mxu0 0.0
    %1633 = vmatprep.subr.mxu0 0.0
    %1634 = vmatpush1.xpose.msra.mxu0 0.0
    %1635 = vmatprep.subr.mxu0 0.0
    %1636 = vmatpush1.xpose.msra.mxu0 0.0
    %1637 = vmatprep.subr.mxu0 0.0
    %1638 = vmatpush1.xpose.msra.mxu0 0.0
    %1639 = vmatprep.subr.mxu0 0.0
    %1640 = vmatpush1.xpose.msra.mxu0 0.0
    %1641 = vmatprep.subr.mxu0 0.0
    %1642 = vmatpush1.xpose.msra.mxu0 0.0
    %1643 = vmatprep.subr.mxu0 0.0
    %1644 = vmatpush1.xpose.msra.mxu0 0.0
    %1645 = vmatprep.subr.mxu0 0.0
    %1646 = vmatpush1.xpose.msra.mxu0 0.0
    %1647 = vmatprep.subr.mxu0 0.0
    %1648 = vmatpush1.xpose.msra.mxu0 0.0
    %1649 = vmatprep.subr.mxu0 0.0
    %1650 = vmatpush1.xpose.msra.mxu0 0.0
    %1651 = vmatprep.subr.mxu0 0.0
    %1652 = vmatpush1.xpose.msra.mxu0 0.0
    %1653 = vmatprep.subr.mxu0 0.0
    %1654 = vmatpush1.xpose.msra.mxu0 0.0
    %1655 = vmatprep.subr.mxu0 0.0
    %1656 = vmatpush1.xpose.msra.mxu0 0.0
    %1657 = vmatprep.subr.mxu0 0.0
    %1658 = vmatpush1.xpose.msra.mxu0 0.0
    %1659 = vmatprep.subr.mxu0 0.0
    %1660 = vmatpush1.xpose.msra.mxu0 0.0
    %1661 = vmatprep.subr.mxu0 0.0
    %1662 = vmatpush1.xpose.msra.mxu0 0.0
    %1663 = vmatprep.subr.mxu0 0.0
    %1664 = vmatpush1.xpose.msra.mxu0 0.0
    %1665 = vmatprep.subr.mxu0 0.0
    %1666 = vmatpush1.xpose.msra.mxu0 0.0
    %1667 = vmatprep.subr.mxu0 0.0
    %1668 = vmatpush1.xpose.msra.mxu0 0.0
    %1669 = vmatprep.subr.mxu0 0.0
    %1670 = vmatpush1.xpose.msra.mxu0 0.0
    %1671 = vmatprep.subr.mxu0 0.0
    %1672 = vmatpush1.xpose.msra.mxu0 0.0
    %1673 = vmatprep.subr.mxu0 0.0
    %1674 = vmatpush1.xpose.msra.mxu0 0.0
    %1675 = vmatprep.subr.mxu0 0.0
    %1676 = vmatpush1.xpose.msra.mxu0 0.0
    %1677 = vmatprep.subr.mxu0 0.0
    %1678 = vmatpush1.xpose.msra.mxu0 0.0
    %1679 = vmatprep.subr.mxu0 0.0
    %1680 = vmatpush1.xpose.msra.mxu0 0.0
    %1681 = vmatprep.subr.mxu0 0.0
    %1682 = vmatpush1.xpose.msra.mxu0 0.0
    %1683 = vmatprep.subr.mxu0 0.0
    %1684 = vmatpush1.xpose.msra.mxu0 0.0
    %1685 = vmatprep.subr.mxu0 0.0
    %1686 = vmatpush1.xpose.msra.mxu0 0.0
    %1687 = vmatprep.subr.mxu0 0.0
    %1688 = vmatpush1.xpose.msra.mxu0 0.0
    %1689 = vmatprep.subr.mxu0 0.0
    %1690 = vmatpush1.xpose.msra.mxu0 0.0
    %1691 = vmatprep.mubr.f32.mxu0 0.0
    %1692 = vmatmul.mubr.f32.gmra.mrb[0].mxu0 %v1622
    %v1693 = vpop.f32.mrb[0].mxu0
    %v1694 = vadd.f32 0.0, %v1693
    %v1695 = vpop.f32.mrb[0].mxu0
    %1696 = vdwg.mxu0
    %v1698 = vsel %vm647, %v1288, 0
    %v1701 = vsel %vm647, %v632, 0
    %1703 = vmatprep.subr.mxu0 0.0
    %1704 = vmatpush1.xpose.msra.mxu0 %v1701
    %1705 = vmatprep.subr.mxu0 0.0
    %1706 = vmatpush1.xpose.msra.mxu0 0.0
    %1707 = vmatprep.subr.mxu0 0.0
    %1708 = vmatpush1.xpose.msra.mxu0 0.0
    %1709 = vmatprep.subr.mxu0 0.0
    %1710 = vmatpush1.xpose.msra.mxu0 0.0
    %1711 = vmatprep.subr.mxu0 0.0
    %1712 = vmatpush1.xpose.msra.mxu0 0.0
    %1713 = vmatprep.subr.mxu0 0.0
    %1714 = vmatpush1.xpose.msra.mxu0 0.0
    %1715 = vmatprep.subr.mxu0 0.0
    %1716 = vmatpush1.xpose.msra.mxu0 0.0
    %1717 = vmatprep.subr.mxu0 0.0
    %1718 = vmatpush1.xpose.msra.mxu0 0.0
    %1719 = vmatprep.subr.mxu0 0.0
    %1720 = vmatpush1.xpose.msra.mxu0 0.0
    %1721 = vmatprep.subr.mxu0 0.0
    %1722 = vmatpush1.xpose.msra.mxu0 0.0
    %1723 = vmatprep.subr.mxu0 0.0
    %1724 = vmatpush1.xpose.msra.mxu0 0.0
    %1725 = vmatprep.subr.mxu0 0.0
    %1726 = vmatpush1.xpose.msra.mxu0 0.0
    %1727 = vmatprep.subr.mxu0 0.0
    %1728 = vmatpush1.xpose.msra.mxu0 0.0
    %1729 = vmatprep.subr.mxu0 0.0
    %1730 = vmatpush1.xpose.msra.mxu0 0.0
    %1731 = vmatprep.subr.mxu0 0.0
    %1732 = vmatpush1.xpose.msra.mxu0 0.0
    %1733 = vmatprep.subr.mxu0 0.0
    %1734 = vmatpush1.xpose.msra.mxu0 0.0
    %1735 = vmatprep.subr.mxu0 0.0
    %1736 = vmatpush1.xpose.msra.mxu0 0.0
    %1737 = vmatprep.subr.mxu0 0.0
    %1738 = vmatpush1.xpose.msra.mxu0 0.0
    %1739 = vmatprep.subr.mxu0 0.0
    %1740 = vmatpush1.xpose.msra.mxu0 0.0
    %1741 = vmatprep.subr.mxu0 0.0
    %1742 = vmatpush1.xpose.msra.mxu0 0.0
    %1743 = vmatprep.subr.mxu0 0.0
    %1744 = vmatpush1.xpose.msra.mxu0 0.0
    %1745 = vmatprep.subr.mxu0 0.0
    %1746 = vmatpush1.xpose.msra.mxu0 0.0
    %1747 = vmatprep.subr.mxu0 0.0
    %1748 = vmatpush1.xpose.msra.mxu0 0.0
    %1749 = vmatprep.subr.mxu0 0.0
    %1750 = vmatpush1.xpose.msra.mxu0 0.0
    %1751 = vmatprep.subr.mxu0 0.0
    %1752 = vmatpush1.xpose.msra.mxu0 0.0
    %1753 = vmatprep.subr.mxu0 0.0
    %1754 = vmatpush1.xpose.msra.mxu0 0.0
    %1755 = vmatprep.subr.mxu0 0.0
    %1756 = vmatpush1.xpose.msra.mxu0 0.0
    %1757 = vmatprep.subr.mxu0 0.0
    %1758 = vmatpush1.xpose.msra.mxu0 0.0
    %1759 = vmatprep.subr.mxu0 0.0
    %1760 = vmatpush1.xpose.msra.mxu0 0.0
    %1761 = vmatprep.subr.mxu0 0.0
    %1762 = vmatpush1.xpose.msra.mxu0 0.0
    %1763 = vmatprep.subr.mxu0 0.0
    %1764 = vmatpush1.xpose.msra.mxu0 0.0
    %1765 = vmatprep.subr.mxu0 0.0
    %1766 = vmatpush1.xpose.msra.mxu0 0.0
    %1767 = vmatprep.mubr.f32.mxu0 0.0
    %1768 = vmatmul.mubr.f32.gmra.mrb[0].mxu0 %v1698
    %v1769 = vpop.f32.mrb[0].mxu0
    %v1770 = vadd.f32 0.0, %v1769
    %v1771 = vpop.f32.mrb[0].mxu0
    %1772 = vdwg.mxu0
    %v1774 = vsel %vm647, %v1290, 0
    %v1777 = vsel %vm647, %v633, 0
    %1779 = vmatprep.subr.mxu0 0.0
    %1780 = vmatpush1.xpose.msra.mxu0 %v1777
    %1781 = vmatprep.subr.mxu0 0.0
    %1782 = vmatpush1.xpose.msra.mxu0 0.0
    %1783 = vmatprep.subr.mxu0 0.0
    %1784 = vmatpush1.xpose.msra.mxu0 0.0
    %1785 = vmatprep.subr.mxu0 0.0
    %1786 = vmatpush1.xpose.msra.mxu0 0.0
    %1787 = vmatprep.subr.mxu0 0.0
    %1788 = vmatpush1.xpose.msra.mxu0 0.0
    %1789 = vmatprep.subr.mxu0 0.0
    %1790 = vmatpush1.xpose.msra.mxu0 0.0
    %1791 = vmatprep.subr.mxu0 0.0
    %1792 = vmatpush1.xpose.msra.mxu0 0.0
    %1793 = vmatprep.subr.mxu0 0.0
    %1794 = vmatpush1.xpose.msra.mxu0 0.0
    %1795 = vmatprep.subr.mxu0 0.0
    %1796 = vmatpush1.xpose.msra.mxu0 0.0
    %1797 = vmatprep.subr.mxu0 0.0
    %1798 = vmatpush1.xpose.msra.mxu0 0.0
    %1799 = vmatprep.subr.mxu0 0.0
    %1800 = vmatpush1.xpose.msra.mxu0 0.0
    %1801 = vmatprep.subr.mxu0 0.0
    %1802 = vmatpush1.xpose.msra.mxu0 0.0
    %1803 = vmatprep.subr.mxu0 0.0
    %1804 = vmatpush1.xpose.msra.mxu0 0.0
    %1805 = vmatprep.subr.mxu0 0.0
    %1806 = vmatpush1.xpose.msra.mxu0 0.0
    %1807 = vmatprep.subr.mxu0 0.0
    %1808 = vmatpush1.xpose.msra.mxu0 0.0
    %1809 = vmatprep.subr.mxu0 0.0
    %1810 = vmatpush1.xpose.msra.mxu0 0.0
    %1811 = vmatprep.subr.mxu0 0.0
    %1812 = vmatpush1.xpose.msra.mxu0 0.0
    %1813 = vmatprep.subr.mxu0 0.0
    %1814 = vmatpush1.xpose.msra.mxu0 0.0
    %1815 = vmatprep.subr.mxu0 0.0
    %1816 = vmatpush1.xpose.msra.mxu0 0.0
    %1817 = vmatprep.subr.mxu0 0.0
    %1818 = vmatpush1.xpose.msra.mxu0 0.0
    %1819 = vmatprep.subr.mxu0 0.0
    %1820 = vmatpush1.xpose.msra.mxu0 0.0
    %1821 = vmatprep.subr.mxu0 0.0
    %1822 = vmatpush1.xpose.msra.mxu0 0.0
    %1823 = vmatprep.subr.mxu0 0.0
    %1824 = vmatpush1.xpose.msra.mxu0 0.0
    %1825 = vmatprep.subr.mxu0 0.0
    %1826 = vmatpush1.xpose.msra.mxu0 0.0
    %1827 = vmatprep.subr.mxu0 0.0
    %1828 = vmatpush1.xpose.msra.mxu0 0.0
    %1829 = vmatprep.subr.mxu0 0.0
    %1830 = vmatpush1.xpose.msra.mxu0 0.0
    %1831 = vmatprep.subr.mxu0 0.0
    %1832 = vmatpush1.xpose.msra.mxu0 0.0
    %1833 = vmatprep.subr.mxu0 0.0
    %1834 = vmatpush1.xpose.msra.mxu0 0.0
    %1835 = vmatprep.subr.mxu0 0.0
    %1836 = vmatpush1.xpose.msra.mxu0 0.0
    %1837 = vmatprep.subr.mxu0 0.0
    %1838 = vmatpush1.xpose.msra.mxu0 0.0
    %1839 = vmatprep.subr.mxu0 0.0
    %1840 = vmatpush1.xpose.msra.mxu0 0.0
    %1841 = vmatprep.subr.mxu0 0.0
    %1842 = vmatpush1.xpose.msra.mxu0 0.0
    %1843 = vmatprep.mubr.f32.mxu0 0.0
    %1844 = vmatmul.mubr.f32.gmra.mrb[0].mxu0 %v1774
    %v1845 = vpop.f32.mrb[0].mxu0
    %v1846 = vadd.f32 0.0, %v1845
    %v1847 = vpop.f32.mrb[0].mxu0
    %1848 = vdwg.mxu0
    %v1850 = vsel %vm647, %v1292, 0
    %v1853 = vsel %vm647, %v634, 0
    %1855 = vmatprep.subr.mxu0 0.0
    %1856 = vmatpush1.xpose.msra.mxu0 %v1853
    %1857 = vmatprep.subr.mxu0 0.0
    %1858 = vmatpush1.xpose.msra.mxu0 0.0
    %1859 = vmatprep.subr.mxu0 0.0
    %1860 = vmatpush1.xpose.msra.mxu0 0.0
    %1861 = vmatprep.subr.mxu0 0.0
    %1862 = vmatpush1.xpose.msra.mxu0 0.0
    %1863 = vmatprep.subr.mxu0 0.0
    %1864 = vmatpush1.xpose.msra.mxu0 0.0
    %1865 = vmatprep.subr.mxu0 0.0
    %1866 = vmatpush1.xpose.msra.mxu0 0.0
    %1867 = vmatprep.subr.mxu0 0.0
    %1868 = vmatpush1.xpose.msra.mxu0 0.0
    %1869 = vmatprep.subr.mxu0 0.0
    %1870 = vmatpush1.xpose.msra.mxu0 0.0
    %1871 = vmatprep.subr.mxu0 0.0
    %1872 = vmatpush1.xpose.msra.mxu0 0.0
    %1873 = vmatprep.subr.mxu0 0.0
    %1874 = vmatpush1.xpose.msra.mxu0 0.0
    %1875 = vmatprep.subr.mxu0 0.0
    %1876 = vmatpush1.xpose.msra.mxu0 0.0
    %1877 = vmatprep.subr.mxu0 0.0
    %1878 = vmatpush1.xpose.msra.mxu0 0.0
    %1879 = vmatprep.subr.mxu0 0.0
    %1880 = vmatpush1.xpose.msra.mxu0 0.0
    %1881 = vmatprep.subr.mxu0 0.0
    %1882 = vmatpush1.xpose.msra.mxu0 0.0
    %1883 = vmatprep.subr.mxu0 0.0
    %1884 = vmatpush1.xpose.msra.mxu0 0.0
    %1885 = vmatprep.subr.mxu0 0.0
    %1886 = vmatpush1.xpose.msra.mxu0 0.0
    %1887 = vmatprep.subr.mxu0 0.0
    %1888 = vmatpush1.xpose.msra.mxu0 0.0
    %1889 = vmatprep.subr.mxu0 0.0
    %1890 = vmatpush1.xpose.msra.mxu0 0.0
    %1891 = vmatprep.subr.mxu0 0.0
    %1892 = vmatpush1.xpose.msra.mxu0 0.0
    %1893 = vmatprep.subr.mxu0 0.0
    %1894 = vmatpush1.xpose.msra.mxu0 0.0
    %1895 = vmatprep.subr.mxu0 0.0
    %1896 = vmatpush1.xpose.msra.mxu0 0.0
    %1897 = vmatprep.subr.mxu0 0.0
    %1898 = vmatpush1.xpose.msra.mxu0 0.0
    %1899 = vmatprep.subr.mxu0 0.0
    %1900 = vmatpush1.xpose.msra.mxu0 0.0
    %1901 = vmatprep.subr.mxu0 0.0
    %1902 = vmatpush1.xpose.msra.mxu0 0.0
    %1903 = vmatprep.subr.mxu0 0.0
    %1904 = vmatpush1.xpose.msra.mxu0 0.0
    %1905 = vmatprep.subr.mxu0 0.0
    %1906 = vmatpush1.xpose.msra.mxu0 0.0
    %1907 = vmatprep.subr.mxu0 0.0
    %1908 = vmatpush1.xpose.msra.mxu0 0.0
    %1909 = vmatprep.subr.mxu0 0.0
    %1910 = vmatpush1.xpose.msra.mxu0 0.0
    %1911 = vmatprep.subr.mxu0 0.0
    %1912 = vmatpush1.xpose.msra.mxu0 0.0
    %1913 = vmatprep.subr.mxu0 0.0
    %1914 = vmatpush1.xpose.msra.mxu0 0.0
    %1915 = vmatprep.subr.mxu0 0.0
    %1916 = vmatpush1.xpose.msra.mxu0 0.0
    %1917 = vmatprep.subr.mxu0 0.0
    %1918 = vmatpush1.xpose.msra.mxu0 0.0
    %1919 = vmatprep.mubr.f32.mxu0 0.0
    %1920 = vmatmul.mubr.f32.gmra.mrb[0].mxu0 %v1850
    %v1921 = vpop.f32.mrb[0].mxu0
    %v1922 = vadd.f32 0.0, %v1921
    %v1923 = vpop.f32.mrb[0].mxu0
    %1924 = vdwg.mxu0
    %v1925 = vrcp.pop %v1295
    %v1926 = vrcp.pop %v1298
    %v1927 = vrcp.pop %v1301
    %v1928 = vrcp.pop %v1304
    %v1929 = vrcp.pop %v1307
    %v1930 = vrcp.pop %v1310
    %v1931 = vrcp.pop %v1313
    %v1932 = vrcp.pop %v1316
    %v1933 = vmul.f32 %v1390, %v1925
    %v1934 = vmul.f32 %v1466, %v1926
    %v1935 = vmul.f32 %v1542, %v1927
    %v1936 = vmul.f32 %v1618, %v1928
    %v1937 = vmul.f32 %v1694, %v1929
    %v1938 = vmul.f32 %v1770, %v1930
    %v1939 = vmul.f32 %v1846, %v1931
    %v1940 = vmul.f32 %v1922, %v1932
    %1941 = vxpose.xlu0.b32.start [1/16] %v1933, 128
    %1942 = vxpose.xlu0.b32.cont [2/16] 0.0, 128
    %1943 = vxpose.xlu0.b32.cont [3/16] 0.0, 128
    %1944 = vxpose.xlu0.b32.cont [4/16] 0.0, 128
    %1945 = vxpose.xlu0.b32.cont [5/16] 0.0, 128
    %1946 = vxpose.xlu0.b32.cont [6/16] 0.0, 128
    %1947 = vxpose.xlu0.b32.cont [7/16] 0.0, 128
    %1948 = vxpose.xlu0.b32.cont [8/16] 0.0, 128
    %1949 = vxpose.xlu0.b32.cont [9/16] 0.0, 128
    %1950 = vxpose.xlu0.b32.cont [10/16] 0.0, 128
    %1951 = vxpose.xlu0.b32.cont [11/16] 0.0, 128
    %1952 = vxpose.xlu0.b32.cont [12/16] 0.0, 128
    %1953 = vxpose.xlu0.b32.cont [13/16] 0.0, 128
    %1954 = vxpose.xlu0.b32.cont [14/16] 0.0, 128
    %1955 = vxpose.xlu0.b32.cont [15/16] 0.0, 128
    %1956 = vxpose.xlu0.b32.end [16/16] 0.0, 128
    %v1957 = vpop.trf.xlu0
    %v1958 = vpop.trf.xlu0
    %v1959 = vpop.trf.xlu0
    %v1960 = vpop.trf.xlu0
    %v1961 = vpop.trf.xlu0
    %v1962 = vpop.trf.xlu0
    %v1963 = vpop.trf.xlu0
    %v1964 = vpop.trf.xlu0
    %v1965 = vpop.trf.xlu0
    %v1966 = vpop.trf.xlu0
    %v1967 = vpop.trf.xlu0
    %v1968 = vpop.trf.xlu0
    %v1969 = vpop.trf.xlu0
    %v1970 = vpop.trf.xlu0
    %v1971 = vpop.trf.xlu0
    %v1972 = vpop.trf.xlu0
    %1973 = vxpose.xlu0.b32.start [1/16] %v1934, 128
    %1974 = vxpose.xlu0.b32.cont [2/16] 0.0, 128
    %1975 = vxpose.xlu0.b32.cont [3/16] 0.0, 128
    %1976 = vxpose.xlu0.b32.cont [4/16] 0.0, 128
    %1977 = vxpose.xlu0.b32.cont [5/16] 0.0, 128
    %1978 = vxpose.xlu0.b32.cont [6/16] 0.0, 128
    %1979 = vxpose.xlu0.b32.cont [7/16] 0.0, 128
    %1980 = vxpose.xlu0.b32.cont [8/16] 0.0, 128
    %1981 = vxpose.xlu0.b32.cont [9/16] 0.0, 128
    %1982 = vxpose.xlu0.b32.cont [10/16] 0.0, 128
    %1983 = vxpose.xlu0.b32.cont [11/16] 0.0, 128
    %1984 = vxpose.xlu0.b32.cont [12/16] 0.0, 128
    %1985 = vxpose.xlu0.b32.cont [13/16] 0.0, 128
    %1986 = vxpose.xlu0.b32.cont [14/16] 0.0, 128
    %1987 = vxpose.xlu0.b32.cont [15/16] 0.0, 128
    %1988 = vxpose.xlu0.b32.end [16/16] 0.0, 128
    %v1989 = vpop.trf.xlu0
    %v1990 = vpop.trf.xlu0
    %v1991 = vpop.trf.xlu0
    %v1992 = vpop.trf.xlu0
    %v1993 = vpop.trf.xlu0
    %v1994 = vpop.trf.xlu0
    %v1995 = vpop.trf.xlu0
    %v1996 = vpop.trf.xlu0
    %v1997 = vpop.trf.xlu0
    %v1998 = vpop.trf.xlu0
    %v1999 = vpop.trf.xlu0
    %v2000 = vpop.trf.xlu0
    %v2001 = vpop.trf.xlu0
    %v2002 = vpop.trf.xlu0
    %v2003 = vpop.trf.xlu0
    %v2004 = vpop.trf.xlu0
    %2005 = vxpose.xlu0.b32.start [1/16] %v1935, 128
    %2006 = vxpose.xlu0.b32.cont [2/16] 0.0, 128
    %2007 = vxpose.xlu0.b32.cont [3/16] 0.0, 128
    %2008 = vxpose.xlu0.b32.cont [4/16] 0.0, 128
    %2009 = vxpose.xlu0.b32.cont [5/16] 0.0, 128
    %2010 = vxpose.xlu0.b32.cont [6/16] 0.0, 128
    %2011 = vxpose.xlu0.b32.cont [7/16] 0.0, 128
    %2012 = vxpose.xlu0.b32.cont [8/16] 0.0, 128
    %2013 = vxpose.xlu0.b32.cont [9/16] 0.0, 128
    %2014 = vxpose.xlu0.b32.cont [10/16] 0.0, 128
    %2015 = vxpose.xlu0.b32.cont [11/16] 0.0, 128
    %2016 = vxpose.xlu0.b32.cont [12/16] 0.0, 128
    %2017 = vxpose.xlu0.b32.cont [13/16] 0.0, 128
    %2018 = vxpose.xlu0.b32.cont [14/16] 0.0, 128
    %2019 = vxpose.xlu0.b32.cont [15/16] 0.0, 128
    %2020 = vxpose.xlu0.b32.end [16/16] 0.0, 128
    %v2021 = vpop.trf.xlu0
    %v2022 = vpop.trf.xlu0
    %v2023 = vpop.trf.xlu0
    %v2024 = vpop.trf.xlu0
    %v2025 = vpop.trf.xlu0
    %v2026 = vpop.trf.xlu0
    %v2027 = vpop.trf.xlu0
    %v2028 = vpop.trf.xlu0
    %v2029 = vpop.trf.xlu0
    %v2030 = vpop.trf.xlu0
    %v2031 = vpop.trf.xlu0
    %v2032 = vpop.trf.xlu0
    %v2033 = vpop.trf.xlu0
    %v2034 = vpop.trf.xlu0
    %v2035 = vpop.trf.xlu0
    %v2036 = vpop.trf.xlu0
    %2037 = vxpose.xlu0.b32.start [1/16] %v1936, 128
    %2038 = vxpose.xlu0.b32.cont [2/16] 0.0, 128
    %2039 = vxpose.xlu0.b32.cont [3/16] 0.0, 128
    %2040 = vxpose.xlu0.b32.cont [4/16] 0.0, 128
    %2041 = vxpose.xlu0.b32.cont [5/16] 0.0, 128
    %2042 = vxpose.xlu0.b32.cont [6/16] 0.0, 128
    %2043 = vxpose.xlu0.b32.cont [7/16] 0.0, 128
    %2044 = vxpose.xlu0.b32.cont [8/16] 0.0, 128
    %2045 = vxpose.xlu0.b32.cont [9/16] 0.0, 128
    %2046 = vxpose.xlu0.b32.cont [10/16] 0.0, 128
    %2047 = vxpose.xlu0.b32.cont [11/16] 0.0, 128
    %2048 = vxpose.xlu0.b32.cont [12/16] 0.0, 128
    %2049 = vxpose.xlu0.b32.cont [13/16] 0.0, 128
    %2050 = vxpose.xlu0.b32.cont [14/16] 0.0, 128
    %2051 = vxpose.xlu0.b32.cont [15/16] 0.0, 128
    %2052 = vxpose.xlu0.b32.end [16/16] 0.0, 128
    %v2053 = vpop.trf.xlu0
    %v2054 = vpop.trf.xlu0
    %v2055 = vpop.trf.xlu0
    %v2056 = vpop.trf.xlu0
    %v2057 = vpop.trf.xlu0
    %v2058 = vpop.trf.xlu0
    %v2059 = vpop.trf.xlu0
    %v2060 = vpop.trf.xlu0
    %v2061 = vpop.trf.xlu0
    %v2062 = vpop.trf.xlu0
    %v2063 = vpop.trf.xlu0
    %v2064 = vpop.trf.xlu0
    %v2065 = vpop.trf.xlu0
    %v2066 = vpop.trf.xlu0
    %v2067 = vpop.trf.xlu0
    %v2068 = vpop.trf.xlu0
    %2069 = vxpose.xlu0.b32.start [1/16] %v1937, 128
    %2070 = vxpose.xlu0.b32.cont [2/16] 0.0, 128
    %2071 = vxpose.xlu0.b32.cont [3/16] 0.0, 128
    %2072 = vxpose.xlu0.b32.cont [4/16] 0.0, 128
    %2073 = vxpose.xlu0.b32.cont [5/16] 0.0, 128
    %2074 = vxpose.xlu0.b32.cont [6/16] 0.0, 128
    %2075 = vxpose.xlu0.b32.cont [7/16] 0.0, 128
    %2076 = vxpose.xlu0.b32.cont [8/16] 0.0, 128
    %2077 = vxpose.xlu0.b32.cont [9/16] 0.0, 128
    %2078 = vxpose.xlu0.b32.cont [10/16] 0.0, 128
    %2079 = vxpose.xlu0.b32.cont [11/16] 0.0, 128
    %2080 = vxpose.xlu0.b32.cont [12/16] 0.0, 128
    %2081 = vxpose.xlu0.b32.cont [13/16] 0.0, 128
    %2082 = vxpose.xlu0.b32.cont [14/16] 0.0, 128
    %2083 = vxpose.xlu0.b32.cont [15/16] 0.0, 128
    %2084 = vxpose.xlu0.b32.end [16/16] 0.0, 128
    %v2085 = vpop.trf.xlu0
    %v2086 = vpop.trf.xlu0
    %v2087 = vpop.trf.xlu0
    %v2088 = vpop.trf.xlu0
    %v2089 = vpop.trf.xlu0
    %v2090 = vpop.trf.xlu0
    %v2091 = vpop.trf.xlu0
    %v2092 = vpop.trf.xlu0
    %v2093 = vpop.trf.xlu0
    %v2094 = vpop.trf.xlu0
    %v2095 = vpop.trf.xlu0
    %v2096 = vpop.trf.xlu0
    %v2097 = vpop.trf.xlu0
    %v2098 = vpop.trf.xlu0
    %v2099 = vpop.trf.xlu0
    %v2100 = vpop.trf.xlu0
    %2101 = vxpose.xlu0.b32.start [1/16] %v1938, 128
    %2102 = vxpose.xlu0.b32.cont [2/16] 0.0, 128
    %2103 = vxpose.xlu0.b32.cont [3/16] 0.0, 128
    %2104 = vxpose.xlu0.b32.cont [4/16] 0.0, 128
    %2105 = vxpose.xlu0.b32.cont [5/16] 0.0, 128
    %2106 = vxpose.xlu0.b32.cont [6/16] 0.0, 128
    %2107 = vxpose.xlu0.b32.cont [7/16] 0.0, 128
    %2108 = vxpose.xlu0.b32.cont [8/16] 0.0, 128
    %2109 = vxpose.xlu0.b32.cont [9/16] 0.0, 128
    %2110 = vxpose.xlu0.b32.cont [10/16] 0.0, 128
    %2111 = vxpose.xlu0.b32.cont [11/16] 0.0, 128
    %2112 = vxpose.xlu0.b32.cont [12/16] 0.0, 128
    %2113 = vxpose.xlu0.b32.cont [13/16] 0.0, 128
    %2114 = vxpose.xlu0.b32.cont [14/16] 0.0, 128
    %2115 = vxpose.xlu0.b32.cont [15/16] 0.0, 128
    %2116 = vxpose.xlu0.b32.end [16/16] 0.0, 128
    %v2117 = vpop.trf.xlu0
    %v2118 = vpop.trf.xlu0
    %v2119 = vpop.trf.xlu0
    %v2120 = vpop.trf.xlu0
    %v2121 = vpop.trf.xlu0
    %v2122 = vpop.trf.xlu0
    %v2123 = vpop.trf.xlu0
    %v2124 = vpop.trf.xlu0
    %v2125 = vpop.trf.xlu0
    %v2126 = vpop.trf.xlu0
    %v2127 = vpop.trf.xlu0
    %v2128 = vpop.trf.xlu0
    %v2129 = vpop.trf.xlu0
    %v2130 = vpop.trf.xlu0
    %v2131 = vpop.trf.xlu0
    %v2132 = vpop.trf.xlu0
    %2133 = vxpose.xlu0.b32.start [1/16] %v1939, 128
    %2134 = vxpose.xlu0.b32.cont [2/16] 0.0, 128
    %2135 = vxpose.xlu0.b32.cont [3/16] 0.0, 128
    %2136 = vxpose.xlu0.b32.cont [4/16] 0.0, 128
    %2137 = vxpose.xlu0.b32.cont [5/16] 0.0, 128
    %2138 = vxpose.xlu0.b32.cont [6/16] 0.0, 128
    %2139 = vxpose.xlu0.b32.cont [7/16] 0.0, 128
    %2140 = vxpose.xlu0.b32.cont [8/16] 0.0, 128
    %2141 = vxpose.xlu0.b32.cont [9/16] 0.0, 128
    %2142 = vxpose.xlu0.b32.cont [10/16] 0.0, 128
    %2143 = vxpose.xlu0.b32.cont [11/16] 0.0, 128
    %2144 = vxpose.xlu0.b32.cont [12/16] 0.0, 128
    %2145 = vxpose.xlu0.b32.cont [13/16] 0.0, 128
    %2146 = vxpose.xlu0.b32.cont [14/16] 0.0, 128
    %2147 = vxpose.xlu0.b32.cont [15/16] 0.0, 128
    %2148 = vxpose.xlu0.b32.end [16/16] 0.0, 128
    %v2149 = vpop.trf.xlu0
    %v2150 = vpop.trf.xlu0
    %v2151 = vpop.trf.xlu0
    %v2152 = vpop.trf.xlu0
    %v2153 = vpop.trf.xlu0
    %v2154 = vpop.trf.xlu0
    %v2155 = vpop.trf.xlu0
    %v2156 = vpop.trf.xlu0
    %v2157 = vpop.trf.xlu0
    %v2158 = vpop.trf.xlu0
    %v2159 = vpop.trf.xlu0
    %v2160 = vpop.trf.xlu0
    %v2161 = vpop.trf.xlu0
    %v2162 = vpop.trf.xlu0
    %v2163 = vpop.trf.xlu0
    %v2164 = vpop.trf.xlu0
    %2165 = vxpose.xlu0.b32.start [1/16] %v1940, 128
    %2166 = vxpose.xlu0.b32.cont [2/16] 0.0, 128
    %2167 = vxpose.xlu0.b32.cont [3/16] 0.0, 128
    %2168 = vxpose.xlu0.b32.cont [4/16] 0.0, 128
    %2169 = vxpose.xlu0.b32.cont [5/16] 0.0, 128
    %2170 = vxpose.xlu0.b32.cont [6/16] 0.0, 128
    %2171 = vxpose.xlu0.b32.cont [7/16] 0.0, 128
    %2172 = vxpose.xlu0.b32.cont [8/16] 0.0, 128
    %2173 = vxpose.xlu0.b32.cont [9/16] 0.0, 128
    %2174 = vxpose.xlu0.b32.cont [10/16] 0.0, 128
    %2175 = vxpose.xlu0.b32.cont [11/16] 0.0, 128
    %2176 = vxpose.xlu0.b32.cont [12/16] 0.0, 128
    %2177 = vxpose.xlu0.b32.cont [13/16] 0.0, 128
    %2178 = vxpose.xlu0.b32.cont [14/16] 0.0, 128
    %2179 = vxpose.xlu0.b32.cont [15/16] 0.0, 128
    %2180 = vxpose.xlu0.b32.end [16/16] 0.0, 128
    %v2181 = vpop.trf.xlu0
    %v2182 = vpop.trf.xlu0
    %v2183 = vpop.trf.xlu0
    %v2184 = vpop.trf.xlu0
    %v2185 = vpop.trf.xlu0
    %v2186 = vpop.trf.xlu0
    %v2187 = vpop.trf.xlu0
    %v2188 = vpop.trf.xlu0
    %v2189 = vpop.trf.xlu0
    %v2190 = vpop.trf.xlu0
    %v2191 = vpop.trf.xlu0
    %v2192 = vpop.trf.xlu0
    %v2193 = vpop.trf.xlu0
    %v2194 = vpop.trf.xlu0
    %v2195 = vpop.trf.xlu0
    %v2196 = vpop.trf.xlu0
    %2197 = vxpose.xlu0.b32.start [1/16] %v1957, 128
    %2198 = vxpose.xlu0.b32.cont [2/16] %v1989, 128
    %2199 = vxpose.xlu0.b32.cont [3/16] %v2021, 128
    %2200 = vxpose.xlu0.b32.cont [4/16] %v2053, 128
    %2201 = vxpose.xlu0.b32.cont [5/16] 0.0, 128
    %2202 = vxpose.xlu0.b32.cont [6/16] 0.0, 128
    %2203 = vxpose.xlu0.b32.cont [7/16] 0.0, 128
    %2204 = vxpose.xlu0.b32.cont [8/16] 0.0, 128
    %2205 = vxpose.xlu0.b32.cont [9/16] 0.0, 128
    %2206 = vxpose.xlu0.b32.cont [10/16] 0.0, 128
    %2207 = vxpose.xlu0.b32.cont [11/16] 0.0, 128
    %2208 = vxpose.xlu0.b32.cont [12/16] 0.0, 128
    %2209 = vxpose.xlu0.b32.cont [13/16] 0.0, 128
    %2210 = vxpose.xlu0.b32.cont [14/16] 0.0, 128
    %2211 = vxpose.xlu0.b32.cont [15/16] 0.0, 128
    %2212 = vxpose.xlu0.b32.end [16/16] 0.0, 128
    %v2213 = vpop.trf.xlu0
    %v2214 = vpop.trf.xlu0
    %v2215 = vpop.trf.xlu0
    %v2216 = vpop.trf.xlu0
    %v2217 = vpop.trf.xlu0
    %v2218 = vpop.trf.xlu0
    %v2219 = vpop.trf.xlu0
    %v2220 = vpop.trf.xlu0
    %v2221 = vpop.trf.xlu0
    %v2222 = vpop.trf.xlu0
    %v2223 = vpop.trf.xlu0
    %v2224 = vpop.trf.xlu0
    %v2225 = vpop.trf.xlu0
    %v2226 = vpop.trf.xlu0
    %v2227 = vpop.trf.xlu0
    %v2228 = vpop.trf.xlu0
    %2229 = vxpose.xlu0.b32.start [1/16] %v2085, 128
    %2230 = vxpose.xlu0.b32.cont [2/16] %v2117, 128
    %2231 = vxpose.xlu0.b32.cont [3/16] %v2149, 128
    %2232 = vxpose.xlu0.b32.cont [4/16] %v2181, 128
    %2233 = vxpose.xlu0.b32.cont [5/16] 0.0, 128
    %2234 = vxpose.xlu0.b32.cont [6/16] 0.0, 128
    %2235 = vxpose.xlu0.b32.cont [7/16] 0.0, 128
    %2236 = vxpose.xlu0.b32.cont [8/16] 0.0, 128
    %2237 = vxpose.xlu0.b32.cont [9/16] 0.0, 128
    %2238 = vxpose.xlu0.b32.cont [10/16] 0.0, 128
    %2239 = vxpose.xlu0.b32.cont [11/16] 0.0, 128
    %2240 = vxpose.xlu0.b32.cont [12/16] 0.0, 128
    %2241 = vxpose.xlu0.b32.cont [13/16] 0.0, 128
    %2242 = vxpose.xlu0.b32.cont [14/16] 0.0, 128
    %2243 = vxpose.xlu0.b32.cont [15/16] 0.0, 128
    %2244 = vxpose.xlu0.b32.end [16/16] 0.0, 128
    %v2245 = vpop.trf.xlu0
    %v2246 = vpop.trf.xlu0
    %v2247 = vpop.trf.xlu0
    %v2248 = vpop.trf.xlu0
    %v2249 = vpop.trf.xlu0
    %v2250 = vpop.trf.xlu0
    %v2251 = vpop.trf.xlu0
    %v2252 = vpop.trf.xlu0
    %v2253 = vpop.trf.xlu0
    %v2254 = vpop.trf.xlu0
    %v2255 = vpop.trf.xlu0
    %v2256 = vpop.trf.xlu0
    %v2257 = vpop.trf.xlu0
    %v2258 = vpop.trf.xlu0
    %v2259 = vpop.trf.xlu0
    %v2260 = vpop.trf.xlu0
    %v2261 = vld [vmem:[#allocation10] sm:$0xff]
    %v2262 = vld [vmem:[#allocation10 + $0x8] sm:$0xff]
    %v2263 = vld [vmem:[#allocation10 + $0x10] sm:$0xff]
    %v2264 = vld [vmem:[#allocation10 + $0x18] sm:$0xff]
    %v2266 = vsel %vm96, %v2213, 0
    %v2269 = vsel %vm96, %v2245, 0
    %2271 = vmatprep.subr.mxu0 0.0
    %2272 = vmatpush1.msra.mxu0 %v2261
    %2273 = vmatprep.subr.mxu0 0.0
    %2274 = vmatpush1.msra.mxu0 %v2262
    %2275 = vmatprep.subr.mxu0 0.0
    %2276 = vmatpush1.msra.mxu0 %v2263
    %2277 = vmatprep.subr.mxu0 0.0
    %2278 = vmatpush1.msra.mxu0 %v2264
    %2279 = vmatprep.subr.mxu0 0.0
    %2280 = vmatpush1.msra.mxu0 0.0
    %2281 = vmatprep.subr.mxu0 0.0
    %2282 = vmatpush1.msra.mxu0 0.0
    %2283 = vmatprep.subr.mxu0 0.0
    %2284 = vmatpush1.msra.mxu0 0.0
    %2285 = vmatprep.subr.mxu0 0.0
    %2286 = vmatpush1.msra.mxu0 0.0
    %2287 = vmatprep.subr.mxu0 0.0
    %2288 = vmatpush1.msra.mxu0 0.0
    %2289 = vmatprep.subr.mxu0 0.0
    %2290 = vmatpush1.msra.mxu0 0.0
    %2291 = vmatprep.subr.mxu0 0.0
    %2292 = vmatpush1.msra.mxu0 0.0
    %2293 = vmatprep.subr.mxu0 0.0
    %2294 = vmatpush1.msra.mxu0 0.0
    %2295 = vmatprep.subr.mxu0 0.0
    %2296 = vmatpush1.msra.mxu0 0.0
    %2297 = vmatprep.subr.mxu0 0.0
    %2298 = vmatpush1.msra.mxu0 0.0
    %2299 = vmatprep.subr.mxu0 0.0
    %2300 = vmatpush1.msra.mxu0 0.0
    %2301 = vmatprep.subr.mxu0 0.0
    %2302 = vmatpush1.msra.mxu0 0.0
    %2303 = vmatprep.subr.mxu0 0.0
    %2304 = vmatpush1.msra.mxu0 0.0
    %2305 = vmatprep.subr.mxu0 0.0
    %2306 = vmatpush1.msra.mxu0 0.0
    %2307 = vmatprep.subr.mxu0 0.0
    %2308 = vmatpush1.msra.mxu0 0.0
    %2309 = vmatprep.subr.mxu0 0.0
    %2310 = vmatpush1.msra.mxu0 0.0
    %2311 = vmatprep.subr.mxu0 0.0
    %2312 = vmatpush1.msra.mxu0 0.0
    %2313 = vmatprep.subr.mxu0 0.0
    %2314 = vmatpush1.msra.mxu0 0.0
    %2315 = vmatprep.subr.mxu0 0.0
    %2316 = vmatpush1.msra.mxu0 0.0
    %2317 = vmatprep.subr.mxu0 0.0
    %2318 = vmatpush1.msra.mxu0 0.0
    %2319 = vmatprep.subr.mxu0 0.0
    %2320 = vmatpush1.msra.mxu0 0.0
    %2321 = vmatprep.subr.mxu0 0.0
    %2322 = vmatpush1.msra.mxu0 0.0
    %2323 = vmatprep.subr.mxu0 0.0
    %2324 = vmatpush1.msra.mxu0 0.0
    %2325 = vmatprep.subr.mxu0 0.0
    %2326 = vmatpush1.msra.mxu0 0.0
    %2327 = vmatprep.subr.mxu0 0.0
    %2328 = vmatpush1.msra.mxu0 0.0
    %2329 = vmatprep.subr.mxu0 0.0
    %2330 = vmatpush1.msra.mxu0 0.0
    %2331 = vmatprep.subr.mxu0 0.0
    %2332 = vmatpush1.msra.mxu0 0.0
    %2333 = vmatprep.subr.mxu0 0.0
    %2334 = vmatpush1.msra.mxu0 0.0
    %2335 = vmatprep.mubr.f32.mxu0 0.0
    %2336 = vmatmul.mubr.f32.gmra.mrb[0].mxu0 %v2266
    %v2337 = vpop.f32.mrb[0].mxu0
    %v2338 = vadd.f32 0.0, %v2337
    %v2339 = vpop.f32.mrb[0].mxu0
    %2340 = vmatprep.mubr.f32.mxu0 0.0
    %2341 = vmatmul.mubr.f32.gmra.mrb[0].mxu0 %v2269
    %v2342 = vpop.f32.mrb[0].mxu0
    %v2343 = vadd.f32 0.0, %v2342
    %v2344 = vpop.f32.mrb[0].mxu0
    %2345 = vdwg.mxu0
    %2346 = vst.msk [vmem:[#allocation11] sm:$0xff] %vm96, %v2338
    %2347 = vst.msk [vmem:[#allocation11 + $0x8] sm:$0xff] %vm96, %v2343
    // Predicated region
    $region42: #{tpu_custom_call.1} parent=1 // pred_check
      _
    $region43: #{tpu_custom_call.1} parent=1 // pred_check_branch
      %2349 = sbr.rel (0) target = $region45
    $region44: #{tpu_custom_call.1} parent=1 // pred_region
      %s2351 = ssub.s32 256, 256
      %2352 = vsyncadd [#allocation4], %s2351
      %s2353 = sshll.u32 [#allocation11], 4
      %s2354 = int_to_ptr.vmem [resolvable:$true] %s2353
      %2359 = dma.vmem_to_hbm [thread:$0]  %s2354, 256, %s5, [#allocation4], 128, 128, 8
    $region45: #{tpu_custom_call.1} parent=1 // pred_fallthru
      _
    // Predicated region
    $region46: #{tpu_custom_call.1} parent=1 // pred_check
      _
    $region47: #{tpu_custom_call.1} parent=1 // pred_check_branch
      %2361 = sbr.rel (0) target = $region49
    $region48: #{tpu_custom_call.1} parent=1 // pred_region
      %2362 = dma.done [#allocation4], 256
    $region49: #{tpu_custom_call.1} parent=1 // pred_fallthru
      _
    %2363 = vsyncpa [#allocation3], 1
    %2364 = vsyncpa [#allocation6], 1
    %2365 = vsyncpa [#allocation9], 1
    %2366 = vsyncpa [#allocation4], 1

</llo_original>
